<compile_context>
chip_gen: v7x
topology: tpu7x:2x2x1
jax: 0.10.0
libtpu: 0.0.40
codegen_flags: <defaults>
</compile_context>

<pallas_src>
import functools

import jax
import jax.numpy as jnp
from jax.experimental import pallas as pl
from jax.experimental.pallas import tpu as pltpu


def _ffn_kernel(x_ref, g_ref, b_ref, w1_ref, b1_ref, w2_ref, b2_ref, o_ref,
                xn_ref, acc_ref, *, eps):
    """Grid = (row_tiles, dff_tiles).  Reduction over dff chunks (axis 1)."""
    k = pl.program_id(1)

    # ----- init phase (first Dff chunk): LayerNorm + zero the accumulator -----
    @pl.when(k == 0)
    def _():
        x = x_ref[...].astype(jnp.float32)
        mean = jnp.mean(x, axis=-1, keepdims=True)
        centered = x - mean
        var = jnp.mean(centered * centered, axis=-1, keepdims=True)
        xn = centered * jax.lax.rsqrt(var + eps)
        xn = xn * g_ref[...].astype(jnp.float32) + b_ref[...].astype(jnp.float32)
        # Store normalized rows once; matmul operands in the weight dtype
        # (bf16 on the fast path), accumulation stays f32.
        xn_ref[...] = xn.astype(xn_ref.dtype)
        acc_ref[...] = jnp.zeros_like(acc_ref)

    # ----- Linear1 chunk: (tm, D) @ (D, tk) + b1[k] -----
    h = jnp.dot(xn_ref[...], w1_ref[...], preferred_element_type=jnp.float32)
    h = h + b1_ref[...].astype(jnp.float32)

    # ----- Activation (SiLU / Swish), f32 on VPU/EUP -----
    h = h * jax.nn.sigmoid(h)

    # TODO(synk): nn.Dropout is identity in eval mode; training-mode dropout
    # (pltpu.prng_random_bits mask) intentionally not applied here.

    # ----- Linear2 chunk accumulate: (tm, tk) @ (tk, D) -> f32 acc -----
    acc_ref[...] += jnp.dot(h.astype(w2_ref.dtype), w2_ref[...],
                            preferred_element_type=jnp.float32)

    # ----- finalize (last Dff chunk): add output bias, cast, store -----
    @pl.when(k == pl.num_programs(1) - 1)
    def _():
        o_ref[...] = (acc_ref[...] + b2_ref[...].astype(jnp.float32)
                      ).astype(o_ref.dtype)


def feed_forward(x, gamma, beta, w1, b1, w2, b2, *, eps=1e-5, tm=256, tk_max=512):
    """x: (batch, seq, d_model) -> (batch, seq, d_model).

    tm:     row (token) tile, multiple of 8; 256 aligns to v6e/v7x MXU, is a
            multiple of 128 for v5e.
    tk_max: max d_feedforward chunk per grid step (multiple of 128).
    """
    B, S, D = x.shape
    Dff = w1.shape[1]
    M = B * S

    # --- pad tokens up to the row tile (padded rows are discarded after) ---
    n_row = pl.cdiv(M, tm)
    M_pad = n_row * tm
    x2d = x.reshape(M, D)
    if M_pad != M:
        x2d = jnp.pad(x2d, ((0, M_pad - M), (0, 0)))

    # --- choose / pad the d_feedforward chunk ---
    if Dff <= tk_max:
        tk, Dff_pad = Dff, Dff
    else:
        tk = tk_max                      # multiple of 128 -> lane-aligned
        Dff_pad = pl.cdiv(Dff, tk) * tk
    if Dff_pad != Dff:
        # Zero-padded Dff columns contribute exactly 0 through SiLU and W2.
        w1 = jnp.pad(w1, ((0, 0), (0, Dff_pad - Dff)))
        b1 = jnp.pad(b1, (0, Dff_pad - Dff))
        w2 = jnp.pad(w2, ((0, Dff_pad - Dff), (0, 0)))
    n_k = Dff_pad // tk

    # Params as 2-D (1, N) rows so they broadcast cleanly on TPU.
    gamma2 = gamma.reshape(1, D)
    beta2 = beta.reshape(1, D)
    b1_2 = b1.reshape(1, Dff_pad)
    b2_2 = b2.reshape(1, D)

    compute_dtype = w1.dtype  # matmul operand dtype (bf16 fast path if bf16)

    # --- explicit scoped-VMEM budget (double-buffered pipelined operands +
    #     persistent scratch), clamped to the v7x physical 64 MiB ---
    def _bpe(a):
        return jnp.dtype(a.dtype).itemsize
    est = 2 * (tm * D * _bpe(x2d)            # x tiles
               + D * tk * _bpe(w1)           # W1 chunk
               + tk * _bpe(b1)               # b1 chunk
               + tk * D * _bpe(w2)           # W2 chunk
               + tm * D * _bpe(x)            # output tiles
               + 3 * D * 4)                  # gamma / beta / b2
    est += tm * D * jnp.dtype(compute_dtype).itemsize   # xn scratch
    est += tm * D * 4                                    # f32 accumulator
    vmem_limit = int(min(max(2 * est, 32 << 20), 64 << 20))

    kernel = functools.partial(_ffn_kernel, eps=eps)

    out2d = pl.pallas_call(
        kernel,
        out_shape=jax.ShapeDtypeStruct((M_pad, D), x.dtype),
        grid_spec=pltpu.PrefetchScalarGridSpec(
            num_scalar_prefetch=0,
            grid=(n_row, n_k),                           # reduction axis last
            in_specs=[
                pl.BlockSpec((tm, D), lambda i, k: (i, 0)),     # x rows tile
                pl.BlockSpec((1, D), lambda i, k: (0, 0)),      # gamma
                pl.BlockSpec((1, D), lambda i, k: (0, 0)),      # beta
                pl.BlockSpec((D, tk), lambda i, k: (0, k)),     # W1 chunk
                pl.BlockSpec((1, tk), lambda i, k: (0, k)),     # b1 chunk
                pl.BlockSpec((tk, D), lambda i, k: (k, 0)),     # W2 chunk
                pl.BlockSpec((1, D), lambda i, k: (0, 0)),      # b2
            ],
            out_specs=pl.BlockSpec((tm, D), lambda i, k: (i, 0)),
            scratch_shapes=[
                pltpu.VMEM((tm, D), compute_dtype),   # normalized rows (reused)
                pltpu.VMEM((tm, D), jnp.float32),     # f32 accumulator
            ],
        ),
        compiler_params=pltpu.CompilerParams(
            dimension_semantics=("parallel", "arbitrary"),
            vmem_limit_bytes=vmem_limit,
        ),
    )(x2d, gamma2, beta2, w1, b1_2, w2, b2_2)

    return out2d[:M].reshape(B, S, D)


def _reference(x, gamma, beta, w1, b1, w2, b2, eps=1e-5):
    xf = x.astype(jnp.float32)
    mean = jnp.mean(xf, axis=-1, keepdims=True)
    var = jnp.mean((xf - mean) ** 2, axis=-1, keepdims=True)
    xn = (xf - mean) * jax.lax.rsqrt(var + eps) * gamma.astype(jnp.float32) \
        + beta.astype(jnp.float32)
    h = xn @ w1.astype(jnp.float32) + b1.astype(jnp.float32)
    h = h * jax.nn.sigmoid(h)
    y = h @ w2.astype(jnp.float32) + b2.astype(jnp.float32)
    return y


if __name__ == "__main__":
    # Small shapes consistent with the module: d_model=32, d_feedforward=64.
    B, S, D, DFF = 2, 8, 32, 64

    key = jax.random.PRNGKey(0)
    kx, kg, kb, kw1, kb1, kw2, kb2 = jax.random.split(key, 7)

    x = jax.random.normal(kx, (B, S, D), dtype=jnp.float32)
    gamma = 1.0 + 0.1 * jax.random.normal(kg, (D,), dtype=jnp.float32)
    beta = 0.1 * jax.random.normal(kb, (D,), dtype=jnp.float32)
    w1 = jax.random.normal(kw1, (D, DFF), dtype=jnp.float32) / jnp.sqrt(D)
    b1 = 0.1 * jax.random.normal(kb1, (DFF,), dtype=jnp.float32)
    w2 = jax.random.normal(kw2, (DFF, D), dtype=jnp.float32) / jnp.sqrt(DFF)
    b2 = 0.1 * jax.random.normal(kb2, (D,), dtype=jnp.float32)

    ref = _reference(x, gamma, beta, w1, b1, w2, b2, eps=1e-5)

    # f32 path (tight tolerance).
    out = feed_forward(x, gamma, beta, w1, b1, w2, b2, eps=1e-5, tm=256)
    out = jax.block_until_ready(out)
    assert out.shape == (B, S, D)
    assert jnp.allclose(out.astype(jnp.float32), ref, atol=1e-4, rtol=1e-4), \
        "f32 path mismatch vs reference"

    # bf16 fast path (MXU-native operands, f32 accumulation; loose tolerance).
    out_bf16 = feed_forward(
        x.astype(jnp.bfloat16),
        gamma.astype(jnp.bfloat16), beta.astype(jnp.bfloat16),
        w1.astype(jnp.bfloat16), b1.astype(jnp.bfloat16),
        w2.astype(jnp.bfloat16), b2.astype(jnp.bfloat16),
        eps=1e-5, tm=256)
    out_bf16 = jax.block_until_ready(out_bf16)
    assert out_bf16.shape == (B, S, D)
    assert bool(jnp.all(jnp.isfinite(out_bf16.astype(jnp.float32))))
    assert jnp.allclose(out_bf16.astype(jnp.float32), ref, atol=0.1, rtol=0.1), \
        "bf16 path mismatch vs reference"

    print("KERNEL_OK")
</pallas_src>

<mosaic_0001>
module attributes {stable_mosaic.version = 11 : i64} {
  func.func @_ffn_kernel(%arg0: i32, %arg1: i32, %arg2: memref<256x32xf32, #tpu.memory_space<vmem>>, %arg3: memref<1x32xf32, #tpu.memory_space<vmem>>, %arg4: memref<1x32xf32, #tpu.memory_space<vmem>>, %arg5: memref<32x64xf32, #tpu.memory_space<vmem>>, %arg6: memref<1x64xf32, #tpu.memory_space<vmem>>, %arg7: memref<64x32xf32, #tpu.memory_space<vmem>>, %arg8: memref<1x32xf32, #tpu.memory_space<vmem>>, %arg9: memref<256x32xf32, #tpu.memory_space<vmem>>, %arg10: memref<256x32xf32, #tpu.memory_space<vmem>>, %arg11: memref<256x32xf32, #tpu.memory_space<vmem>>) attributes {dimension_semantics = [#tpu.dimension_semantics<parallel>, #tpu.dimension_semantics<arbitrary>], iteration_bounds = array<i64: 1, 1>, scalar_prefetch = 0 : i64, scratch_operands = 2 : i64, tpu.core_type = #tpu.core_type<tc>, window_params = [{transform_indices = @transform_0, window_bounds = array<i64: 256, 32>}, {pipeline_mode = #tpu.pipeline_mode<synchronous>, transform_indices = @transform_1, window_bounds = array<i64: 1, 32>}, {pipeline_mode = #tpu.pipeline_mode<synchronous>, transform_indices = @transform_2, window_bounds = array<i64: 1, 32>}, {transform_indices = @transform_3, window_bounds = array<i64: 32, 64>}, {transform_indices = @transform_4, window_bounds = array<i64: 1, 64>}, {transform_indices = @transform_5, window_bounds = array<i64: 64, 32>}, {pipeline_mode = #tpu.pipeline_mode<synchronous>, transform_indices = @transform_6, window_bounds = array<i64: 1, 32>}, {transform_indices = @transform_7, window_bounds = array<i64: 256, 32>}]} {
    %c0_i32 = arith.constant 0 : i32
    %0 = arith.cmpi eq, %arg1, %c0_i32 : i32
    %1 = arith.extui %0 : i1 to i32
    %c0_i32_0 = arith.constant 0 : i32
    %2 = arith.cmpi ne, %1, %c0_i32_0 : i32
    scf.if %2 {
      %c0_16 = arith.constant 0 : index
      %c0_17 = arith.constant 0 : index
      %23 = vector.load %arg2[%c0_16, %c0_17] : memref<256x32xf32, #tpu.memory_space<vmem>>, vector<256x32xf32>
      %cst_18 = arith.constant dense<0.000000e+00> : vector<256xf32>
      %24 = vector.multi_reduction <add>, %23, %cst_18 [1] : vector<256x32xf32> to vector<256xf32>
      %25 = vector.shape_cast %24 : vector<256xf32> to vector<256x1xf32>
      %cst_19 = arith.constant 3.200000e+01 : f32
      %26 = vector.broadcast %cst_19 : f32 to vector<256x1xf32>
      %27 = arith.divf %25, %26 : vector<256x1xf32>
      %28 = vector.broadcast %27 : vector<256x1xf32> to vector<256x32xf32>
      %29 = arith.subf %23, %28 : vector<256x32xf32>
      %30 = arith.mulf %29, %29 : vector<256x32xf32>
      %cst_20 = arith.constant dense<0.000000e+00> : vector<256xf32>
      %31 = vector.multi_reduction <add>, %30, %cst_20 [1] : vector<256x32xf32> to vector<256xf32>
      %32 = vector.shape_cast %31 : vector<256xf32> to vector<256x1xf32>
      %cst_21 = arith.constant 3.200000e+01 : f32
      %33 = vector.broadcast %cst_21 : f32 to vector<256x1xf32>
      %34 = arith.divf %32, %33 : vector<256x1xf32>
      %cst_22 = arith.constant 9.99999974E-6 : f32
      %35 = vector.broadcast %cst_22 : f32 to vector<256x1xf32>
      %36 = arith.addf %34, %35 : vector<256x1xf32>
      %37 = math.rsqrt %36 : vector<256x1xf32>
      %38 = vector.broadcast %37 : vector<256x1xf32> to vector<256x32xf32>
      %39 = arith.mulf %29, %38 : vector<256x32xf32>
      %c0_23 = arith.constant 0 : index
      %c0_24 = arith.constant 0 : index
      %40 = vector.load %arg3[%c0_23, %c0_24] : memref<1x32xf32, #tpu.memory_space<vmem>>, vector<1x32xf32>
      %41 = vector.broadcast %40 : vector<1x32xf32> to vector<256x32xf32>
      %42 = arith.mulf %39, %41 : vector<256x32xf32>
      %c0_25 = arith.constant 0 : index
      %c0_26 = arith.constant 0 : index
      %43 = vector.load %arg4[%c0_25, %c0_26] : memref<1x32xf32, #tpu.memory_space<vmem>>, vector<1x32xf32>
      %44 = vector.broadcast %43 : vector<1x32xf32> to vector<256x32xf32>
      %45 = arith.addf %42, %44 : vector<256x32xf32>
      %c0_27 = arith.constant 0 : index
      %c0_28 = arith.constant 0 : index
      %46 = vector.load %arg10[%c0_27, %c0_28] : memref<256x32xf32, #tpu.memory_space<vmem>>, vector<256x32xf32>
      tpu.vector_store %arg10[%c0_27, %c0_28], %45 {strides = array<i32>} : memref<256x32xf32, #tpu.memory_space<vmem>>, vector<256x32xf32>,
      %cst_29 = arith.constant 0.000000e+00 : f32
      %47 = vector.broadcast %cst_29 : f32 to vector<256x32xf32>
      %c0_30 = arith.constant 0 : index
      %c0_31 = arith.constant 0 : index
      %48 = vector.load %arg11[%c0_30, %c0_31] : memref<256x32xf32, #tpu.memory_space<vmem>>, vector<256x32xf32>
      tpu.vector_store %arg11[%c0_30, %c0_31], %47 {strides = array<i32>} : memref<256x32xf32, #tpu.memory_space<vmem>>, vector<256x32xf32>,
    } else {
    }
    %c0 = arith.constant 0 : index
    %c0_1 = arith.constant 0 : index
    %3 = vector.load %arg10[%c0, %c0_1] : memref<256x32xf32, #tpu.memory_space<vmem>>, vector<256x32xf32>
    %c0_2 = arith.constant 0 : index
    %c0_3 = arith.constant 0 : index
    %4 = vector.load %arg5[%c0_2, %c0_3] : memref<32x64xf32, #tpu.memory_space<vmem>>, vector<32x64xf32>
    %cst = arith.constant dense<0.000000e+00> : vector<256x64xf32>
    %5 = tpu.matmul %3, %4, %cst {dimension_numbers = #tpu.dot_dimension_numbers<[1], [0], [0], [1], [0, 0, 1, 1], [], []>} : vector<256x32xf32>, vector<32x64xf32>, vector<256x64xf32> -> vector<256x64xf32>
    %c0_4 = arith.constant 0 : index
    %c0_5 = arith.constant 0 : index
    %6 = vector.load %arg6[%c0_4, %c0_5] : memref<1x64xf32, #tpu.memory_space<vmem>>, vector<1x64xf32>
    %7 = vector.broadcast %6 : vector<1x64xf32> to vector<256x64xf32>
    %8 = arith.addf %5, %7 : vector<256x64xf32>
    %9 = arith.negf %8 : vector<256x64xf32>
    %10 = math.exp %9 : vector<256x64xf32>
    %cst_6 = arith.constant 1.000000e+00 : f32
    %11 = vector.broadcast %cst_6 : f32 to vector<256x64xf32>
    %12 = arith.addf %11, %10 : vector<256x64xf32>
    %13 = arith.divf %11, %12 : vector<256x64xf32>
    %14 = arith.mulf %8, %13 : vector<256x64xf32>
    %c0_7 = arith.constant 0 : index
    %c0_8 = arith.constant 0 : index
    %15 = vector.load %arg11[%c0_7, %c0_8] : memref<256x32xf32, #tpu.memory_space<vmem>>, vector<256x32xf32>
    %c0_9 = arith.constant 0 : index
    %c0_10 = arith.constant 0 : index
    %16 = vector.load %arg7[%c0_9, %c0_10] : memref<64x32xf32, #tpu.memory_space<vmem>>, vector<64x32xf32>
    %cst_11 = arith.constant dense<0.000000e+00> : vector<256x32xf32>
    %17 = tpu.matmul %14, %16, %cst_11 {dimension_numbers = #tpu.dot_dimension_numbers<[1], [0], [0], [1], [0, 0, 1, 1], [], []>} : vector<256x64xf32>, vector<64x32xf32>, vector<256x32xf32> -> vector<256x32xf32>
    %18 = arith.addf %15, %17 : vector<256x32xf32>
    %c0_12 = arith.constant 0 : index
    %c0_13 = arith.constant 0 : index
    %19 = vector.load %arg11[%c0_12, %c0_13] : memref<256x32xf32, #tpu.memory_space<vmem>>, vector<256x32xf32>
    tpu.vector_store %arg11[%c0_12, %c0_13], %18 {strides = array<i32>} : memref<256x32xf32, #tpu.memory_space<vmem>>, vector<256x32xf32>,
    %c0_i32_14 = arith.constant 0 : i32
    %20 = arith.cmpi eq, %arg1, %c0_i32_14 : i32
    %21 = arith.extui %20 : i1 to i32
    %c0_i32_15 = arith.constant 0 : i32
    %22 = arith.cmpi ne, %21, %c0_i32_15 : i32
    scf.if %22 {
      %c0_16 = arith.constant 0 : index
      %c0_17 = arith.constant 0 : index
      %23 = vector.load %arg11[%c0_16, %c0_17] : memref<256x32xf32, #tpu.memory_space<vmem>>, vector<256x32xf32>
      %c0_18 = arith.constant 0 : index
      %c0_19 = arith.constant 0 : index
      %24 = vector.load %arg8[%c0_18, %c0_19] : memref<1x32xf32, #tpu.memory_space<vmem>>, vector<1x32xf32>
      %25 = vector.broadcast %24 : vector<1x32xf32> to vector<256x32xf32>
      %26 = arith.addf %23, %25 : vector<256x32xf32>
      %c0_20 = arith.constant 0 : index
      %c0_21 = arith.constant 0 : index
      %27 = vector.load %arg9[%c0_20, %c0_21] : memref<256x32xf32, #tpu.memory_space<vmem>>, vector<256x32xf32>
      tpu.vector_store %arg9[%c0_20, %c0_21], %26 {strides = array<i32>} : memref<256x32xf32, #tpu.memory_space<vmem>>, vector<256x32xf32>,
    } else {
    }
    return
  }
  func.func @transform_0(%arg0: i32, %arg1: i32) -> (i32, i32) {
    %c0_i32 = arith.constant 0 : i32
    %c0_i32_0 = arith.constant 0 : i32
    return %arg0, %c0_i32 : i32, i32
  }
  func.func @transform_1(%arg0: i32, %arg1: i32) -> (i32, i32) {
    %c0_i32 = arith.constant 0 : i32
    %c0_i32_0 = arith.constant 0 : i32
    %c0_i32_1 = arith.constant 0 : i32
    return %c0_i32, %c0_i32_0 : i32, i32
  }
  func.func @transform_2(%arg0: i32, %arg1: i32) -> (i32, i32) {
    %c0_i32 = arith.constant 0 : i32
    %c0_i32_0 = arith.constant 0 : i32
    %c0_i32_1 = arith.constant 0 : i32
    return %c0_i32, %c0_i32_0 : i32, i32
  }
  func.func @transform_3(%arg0: i32, %arg1: i32) -> (i32, i32) {
    %c0_i32 = arith.constant 0 : i32
    %c0_i32_0 = arith.constant 0 : i32
    return %c0_i32, %arg1 : i32, i32
  }
  func.func @transform_4(%arg0: i32, %arg1: i32) -> (i32, i32) {
    %c0_i32 = arith.constant 0 : i32
    %c0_i32_0 = arith.constant 0 : i32
    return %c0_i32, %arg1 : i32, i32
  }
  func.func @transform_5(%arg0: i32, %arg1: i32) -> (i32, i32) {
    %c0_i32 = arith.constant 0 : i32
    %c0_i32_0 = arith.constant 0 : i32
    return %arg1, %c0_i32 : i32, i32
  }
  func.func @transform_6(%arg0: i32, %arg1: i32) -> (i32, i32) {
    %c0_i32 = arith.constant 0 : i32
    %c0_i32_0 = arith.constant 0 : i32
    %c0_i32_1 = arith.constant 0 : i32
    return %c0_i32, %c0_i32_0 : i32, i32
  }
  func.func @transform_7(%arg0: i32, %arg1: i32) -> (i32, i32) {
    %c0_i32 = arith.constant 0 : i32
    %c0_i32_0 = arith.constant 0 : i32
    return %arg0, %c0_i32 : i32, i32
  }
}

</mosaic_0001>

<llo_original>
// kernel: tpu_custom_call.1
$region0: #{tpu_custom_call.1}
  #allocation0 [shape = 'u32[]', space=smem, size = 0x4, offset = 0x4, fixed_abs, tag = 'smem constant byte address 0x4 - core index']
  #allocation1 [shape = 'u32[144,128]{1,0:T(1,128)}', space=vmem, size = 0x12000, scoped, tag = 'internal scratch']
  #allocation2 [shape = 'f32[256,32]{1,0:T(8,128)}', space=vmem, size = 0x20000, scoped, tag = 'scratch operand']
  #allocation3 [shape = 'f32[256,32]{1,0:T(8,128)}', space=vmem, size = 0x20000, scoped, tag = 'scratch operand']
  %s0 = inlined_call_operand.vmem [shape: f32[256,32], index: 0, kind: input, shape index: {}]
  %s1 = inlined_call_operand.vmem [shape: f32[1,32], index: 1, kind: input, shape index: {}]
  %s2 = inlined_call_operand.vmem [shape: f32[1,32], index: 2, kind: input, shape index: {}]
  %s3 = inlined_call_operand.vmem [shape: f32[32,64], index: 3, kind: input, shape index: {}]
  %s4 = inlined_call_operand.vmem [shape: f32[1,64], index: 4, kind: input, shape index: {}]
  %s5 = inlined_call_operand.vmem [shape: f32[64,32], index: 5, kind: input, shape index: {}]
  %s6 = inlined_call_operand.vmem [shape: f32[1,32], index: 6, kind: input, shape index: {}]
  %s7 = inlined_call_operand.vmem [shape: f32[256,32], index: 7, kind: output, shape index: {}]
  %s8 = sld [smem:[#allocation0]]
  $region46: #{tpu_custom_call.1} parent=0
    _
  %s10 = ssub.s32 1, %s8
  %s11 = scalar_select 0, %s10, %s8
  // Predicated region
  $region2: #{tpu_custom_call.1} parent=0 // pred_check
    _
  $region3: #{tpu_custom_call.1} parent=0 // pred_check_branch
    %13 = sbr.rel (0) target = $region5
  $region4: #{tpu_custom_call.1} parent=0 // pred_region
    _
  $region5: #{tpu_custom_call.1} parent=0 // pred_fallthru
    _
  // Predicated region
  $region6: #{tpu_custom_call.1} parent=0 // pred_check
    _
  $region7: #{tpu_custom_call.1} parent=0 // pred_check_branch
    %15 = sbr.rel (0) target = $region9
  $region8: #{tpu_custom_call.1} parent=0 // pred_region
    _
  $region9: #{tpu_custom_call.1} parent=0 // pred_fallthru
    _
  // Predicated region
  $region10: #{tpu_custom_call.1} parent=0 // pred_check
    _
  $region11: #{tpu_custom_call.1} parent=0 // pred_check_branch
    %17 = sbr.rel (0) target = $region13
  $region12: #{tpu_custom_call.1} parent=0 // pred_region
    _
  $region13: #{tpu_custom_call.1} parent=0 // pred_fallthru
    _
  // Predicated region
  $region14: #{tpu_custom_call.1} parent=0 // pred_check
    _
  $region15: #{tpu_custom_call.1} parent=0 // pred_check_branch
    %19 = sbr.rel (0) target = $region17
  $region16: #{tpu_custom_call.1} parent=0 // pred_region
    _
  $region17: #{tpu_custom_call.1} parent=0 // pred_fallthru
    _
  // Predicated region
  $region18: #{tpu_custom_call.1} parent=0 // pred_check
    _
  $region19: #{tpu_custom_call.1} parent=0 // pred_check_branch
    %21 = sbr.rel (0) target = $region21
  $region20: #{tpu_custom_call.1} parent=0 // pred_region
    _
  $region21: #{tpu_custom_call.1} parent=0 // pred_fallthru
    _
  // Predicated region
  $region22: #{tpu_custom_call.1} parent=0 // pred_check
    _
  $region23: #{tpu_custom_call.1} parent=0 // pred_check_branch
    %23 = sbr.rel (0) target = $region25
  $region24: #{tpu_custom_call.1} parent=0 // pred_region
    _
  $region25: #{tpu_custom_call.1} parent=0 // pred_fallthru
    _
  // Predicated region
  $region26: #{tpu_custom_call.1} parent=0 // pred_check
    _
  $region27: #{tpu_custom_call.1} parent=0 // pred_check_branch
    %25 = sbr.rel (0) target = $region29
  $region28: #{tpu_custom_call.1} parent=0 // pred_region
    _
  $region29: #{tpu_custom_call.1} parent=0 // pred_fallthru
    _
  %p26 = scmp.eq.s32.totalorder 0, 0
  // Predicated region
  $region30: #{tpu_custom_call.1} parent=0 // pred_check
    %p27 = pneg %p26
  $region31: #{tpu_custom_call.1} parent=0 // pred_check_branch
    %29 = sbr.rel (%p27) target = $region33
  $region32: #{tpu_custom_call.1} parent=0 // pred_region
    %v30 = vld [vmem:[%s0] sm:$0xff]
    %v31 = vld [vmem:[%s0 + $0x8] sm:$0xff]
    %v32 = vld [vmem:[%s0 + $0x10] sm:$0xff]
    %v33 = vld [vmem:[%s0 + $0x18] sm:$0xff]
    %v34 = vld [vmem:[%s0 + $0x20] sm:$0xff]
    %v35 = vld [vmem:[%s0 + $0x28] sm:$0xff]
    %v36 = vld [vmem:[%s0 + $0x30] sm:$0xff]
    %v37 = vld [vmem:[%s0 + $0x38] sm:$0xff]
    %v38 = vld [vmem:[%s0 + $0x40] sm:$0xff]
    %v39 = vld [vmem:[%s0 + $0x48] sm:$0xff]
    %v40 = vld [vmem:[%s0 + $0x50] sm:$0xff]
    %v41 = vld [vmem:[%s0 + $0x58] sm:$0xff]
    %v42 = vld [vmem:[%s0 + $0x60] sm:$0xff]
    %v43 = vld [vmem:[%s0 + $0x68] sm:$0xff]
    %v44 = vld [vmem:[%s0 + $0x70] sm:$0xff]
    %v45 = vld [vmem:[%s0 + $0x78] sm:$0xff]
    %v46 = vld [vmem:[%s0 + $0x80] sm:$0xff]
    %v47 = vld [vmem:[%s0 + $0x88] sm:$0xff]
    %v48 = vld [vmem:[%s0 + $0x90] sm:$0xff]
    %v49 = vld [vmem:[%s0 + $0x98] sm:$0xff]
    %v50 = vld [vmem:[%s0 + $0xa0] sm:$0xff]
    %v51 = vld [vmem:[%s0 + $0xa8] sm:$0xff]
    %v52 = vld [vmem:[%s0 + $0xb0] sm:$0xff]
    %v53 = vld [vmem:[%s0 + $0xb8] sm:$0xff]
    %v54 = vld [vmem:[%s0 + $0xc0] sm:$0xff]
    %v55 = vld [vmem:[%s0 + $0xc8] sm:$0xff]
    %v56 = vld [vmem:[%s0 + $0xd0] sm:$0xff]
    %v57 = vld [vmem:[%s0 + $0xd8] sm:$0xff]
    %v58 = vld [vmem:[%s0 + $0xe0] sm:$0xff]
    %v59 = vld [vmem:[%s0 + $0xe8] sm:$0xff]
    %v60 = vld [vmem:[%s0 + $0xf0] sm:$0xff]
    %v61 = vld [vmem:[%s0 + $0xf8] sm:$0xff]
    %vm62 = vcmask 261120
    %v63 = vsel %vm62, %v30, 0.0
    %64 = vadd.xlane.f32.xlu0 %v63
    %v65 = vpop.xlane.xlu0 %64
    %v66 = vsel %vm62, %v31, 0.0
    %67 = vadd.xlane.f32.xlu0 %v66
    %v68 = vpop.xlane.xlu0 %67
    %v69 = vsel %vm62, %v32, 0.0
    %70 = vadd.xlane.f32.xlu0 %v69
    %v71 = vpop.xlane.xlu0 %70
    %v72 = vsel %vm62, %v33, 0.0
    %73 = vadd.xlane.f32.xlu0 %v72
    %v74 = vpop.xlane.xlu0 %73
    %v75 = vsel %vm62, %v34, 0.0
    %76 = vadd.xlane.f32.xlu0 %v75
    %v77 = vpop.xlane.xlu0 %76
    %v78 = vsel %vm62, %v35, 0.0
    %79 = vadd.xlane.f32.xlu0 %v78
    %v80 = vpop.xlane.xlu0 %79
    %v81 = vsel %vm62, %v36, 0.0
    %82 = vadd.xlane.f32.xlu0 %v81
    %v83 = vpop.xlane.xlu0 %82
    %v84 = vsel %vm62, %v37, 0.0
    %85 = vadd.xlane.f32.xlu0 %v84
    %v86 = vpop.xlane.xlu0 %85
    %v87 = vsel %vm62, %v38, 0.0
    %88 = vadd.xlane.f32.xlu0 %v87
    %v89 = vpop.xlane.xlu0 %88
    %v90 = vsel %vm62, %v39, 0.0
    %91 = vadd.xlane.f32.xlu0 %v90
    %v92 = vpop.xlane.xlu0 %91
    %v93 = vsel %vm62, %v40, 0.0
    %94 = vadd.xlane.f32.xlu0 %v93
    %v95 = vpop.xlane.xlu0 %94
    %v96 = vsel %vm62, %v41, 0.0
    %97 = vadd.xlane.f32.xlu0 %v96
    %v98 = vpop.xlane.xlu0 %97
    %v99 = vsel %vm62, %v42, 0.0
    %100 = vadd.xlane.f32.xlu0 %v99
    %v101 = vpop.xlane.xlu0 %100
    %v102 = vsel %vm62, %v43, 0.0
    %103 = vadd.xlane.f32.xlu0 %v102
    %v104 = vpop.xlane.xlu0 %103
    %v105 = vsel %vm62, %v44, 0.0
    %106 = vadd.xlane.f32.xlu0 %v105
    %v107 = vpop.xlane.xlu0 %106
    %v108 = vsel %vm62, %v45, 0.0
    %109 = vadd.xlane.f32.xlu0 %v108
    %v110 = vpop.xlane.xlu0 %109
    %v111 = vsel %vm62, %v46, 0.0
    %112 = vadd.xlane.f32.xlu0 %v111
    %v113 = vpop.xlane.xlu0 %112
    %v114 = vsel %vm62, %v47, 0.0
    %115 = vadd.xlane.f32.xlu0 %v114
    %v116 = vpop.xlane.xlu0 %115
    %v117 = vsel %vm62, %v48, 0.0
    %118 = vadd.xlane.f32.xlu0 %v117
    %v119 = vpop.xlane.xlu0 %118
    %v120 = vsel %vm62, %v49, 0.0
    %121 = vadd.xlane.f32.xlu0 %v120
    %v122 = vpop.xlane.xlu0 %121
    %v123 = vsel %vm62, %v50, 0.0
    %124 = vadd.xlane.f32.xlu0 %v123
    %v125 = vpop.xlane.xlu0 %124
    %v126 = vsel %vm62, %v51, 0.0
    %127 = vadd.xlane.f32.xlu0 %v126
    %v128 = vpop.xlane.xlu0 %127
    %v129 = vsel %vm62, %v52, 0.0
    %130 = vadd.xlane.f32.xlu0 %v129
    %v131 = vpop.xlane.xlu0 %130
    %v132 = vsel %vm62, %v53, 0.0
    %133 = vadd.xlane.f32.xlu0 %v132
    %v134 = vpop.xlane.xlu0 %133
    %v135 = vsel %vm62, %v54, 0.0
    %136 = vadd.xlane.f32.xlu0 %v135
    %v137 = vpop.xlane.xlu0 %136
    %v138 = vsel %vm62, %v55, 0.0
    %139 = vadd.xlane.f32.xlu0 %v138
    %v140 = vpop.xlane.xlu0 %139
    %v141 = vsel %vm62, %v56, 0.0
    %142 = vadd.xlane.f32.xlu0 %v141
    %v143 = vpop.xlane.xlu0 %142
    %v144 = vsel %vm62, %v57, 0.0
    %145 = vadd.xlane.f32.xlu0 %v144
    %v146 = vpop.xlane.xlu0 %145
    %v147 = vsel %vm62, %v58, 0.0
    %148 = vadd.xlane.f32.xlu0 %v147
    %v149 = vpop.xlane.xlu0 %148
    %v150 = vsel %vm62, %v59, 0.0
    %151 = vadd.xlane.f32.xlu0 %v150
    %v152 = vpop.xlane.xlu0 %151
    %v153 = vsel %vm62, %v60, 0.0
    %154 = vadd.xlane.f32.xlu0 %v153
    %v155 = vpop.xlane.xlu0 %154
    %v156 = vsel %vm62, %v61, 0.0
    %157 = vadd.xlane.f32.xlu0 %v156
    %v158 = vpop.xlane.xlu0 %157
    %v159 = vrcp.pop 32.0
    %v160 = vmul.f32 %v65, %v159
    %v161 = vmul.f32 %v68, %v159
    %v162 = vmul.f32 %v71, %v159
    %v163 = vmul.f32 %v74, %v159
    %v164 = vmul.f32 %v77, %v159
    %v165 = vmul.f32 %v80, %v159
    %v166 = vmul.f32 %v83, %v159
    %v167 = vmul.f32 %v86, %v159
    %v168 = vmul.f32 %v89, %v159
    %v169 = vmul.f32 %v92, %v159
    %v170 = vmul.f32 %v95, %v159
    %v171 = vmul.f32 %v98, %v159
    %v172 = vmul.f32 %v101, %v159
    %v173 = vmul.f32 %v104, %v159
    %v174 = vmul.f32 %v107, %v159
    %v175 = vmul.f32 %v110, %v159
    %v176 = vmul.f32 %v113, %v159
    %v177 = vmul.f32 %v116, %v159
    %v178 = vmul.f32 %v119, %v159
    %v179 = vmul.f32 %v122, %v159
    %v180 = vmul.f32 %v125, %v159
    %v181 = vmul.f32 %v128, %v159
    %v182 = vmul.f32 %v131, %v159
    %v183 = vmul.f32 %v134, %v159
    %v184 = vmul.f32 %v137, %v159
    %v185 = vmul.f32 %v140, %v159
    %v186 = vmul.f32 %v143, %v159
    %v187 = vmul.f32 %v146, %v159
    %v188 = vmul.f32 %v149, %v159
    %v189 = vmul.f32 %v152, %v159
    %v190 = vmul.f32 %v155, %v159
    %v191 = vmul.f32 %v158, %v159
    %v192 = vsub.f32 %v30, %v160
    %v193 = vsub.f32 %v31, %v161
    %v194 = vsub.f32 %v32, %v162
    %v195 = vsub.f32 %v33, %v163
    %v196 = vsub.f32 %v34, %v164
    %v197 = vsub.f32 %v35, %v165
    %v198 = vsub.f32 %v36, %v166
    %v199 = vsub.f32 %v37, %v167
    %v200 = vsub.f32 %v38, %v168
    %v201 = vsub.f32 %v39, %v169
    %v202 = vsub.f32 %v40, %v170
    %v203 = vsub.f32 %v41, %v171
    %v204 = vsub.f32 %v42, %v172
    %v205 = vsub.f32 %v43, %v173
    %v206 = vsub.f32 %v44, %v174
    %v207 = vsub.f32 %v45, %v175
    %v208 = vsub.f32 %v46, %v176
    %v209 = vsub.f32 %v47, %v177
    %v210 = vsub.f32 %v48, %v178
    %v211 = vsub.f32 %v49, %v179
    %v212 = vsub.f32 %v50, %v180
    %v213 = vsub.f32 %v51, %v181
    %v214 = vsub.f32 %v52, %v182
    %v215 = vsub.f32 %v53, %v183
    %v216 = vsub.f32 %v54, %v184
    %v217 = vsub.f32 %v55, %v185
    %v218 = vsub.f32 %v56, %v186
    %v219 = vsub.f32 %v57, %v187
    %v220 = vsub.f32 %v58, %v188
    %v221 = vsub.f32 %v59, %v189
    %v222 = vsub.f32 %v60, %v190
    %v223 = vsub.f32 %v61, %v191
    %v224 = vmul.f32 %v192, %v192
    %v225 = vmul.f32 %v193, %v193
    %v226 = vmul.f32 %v194, %v194
    %v227 = vmul.f32 %v195, %v195
    %v228 = vmul.f32 %v196, %v196
    %v229 = vmul.f32 %v197, %v197
    %v230 = vmul.f32 %v198, %v198
    %v231 = vmul.f32 %v199, %v199
    %v232 = vmul.f32 %v200, %v200
    %v233 = vmul.f32 %v201, %v201
    %v234 = vmul.f32 %v202, %v202
    %v235 = vmul.f32 %v203, %v203
    %v236 = vmul.f32 %v204, %v204
    %v237 = vmul.f32 %v205, %v205
    %v238 = vmul.f32 %v206, %v206
    %v239 = vmul.f32 %v207, %v207
    %v240 = vmul.f32 %v208, %v208
    %v241 = vmul.f32 %v209, %v209
    %v242 = vmul.f32 %v210, %v210
    %v243 = vmul.f32 %v211, %v211
    %v244 = vmul.f32 %v212, %v212
    %v245 = vmul.f32 %v213, %v213
    %v246 = vmul.f32 %v214, %v214
    %v247 = vmul.f32 %v215, %v215
    %v248 = vmul.f32 %v216, %v216
    %v249 = vmul.f32 %v217, %v217
    %v250 = vmul.f32 %v218, %v218
    %v251 = vmul.f32 %v219, %v219
    %v252 = vmul.f32 %v220, %v220
    %v253 = vmul.f32 %v221, %v221
    %v254 = vmul.f32 %v222, %v222
    %v255 = vmul.f32 %v223, %v223
    %v256 = vsel %vm62, %v224, 0.0
    %257 = vadd.xlane.f32.xlu0 %v256
    %v258 = vpop.xlane.xlu0 %257
    %v259 = vsel %vm62, %v225, 0.0
    %260 = vadd.xlane.f32.xlu0 %v259
    %v261 = vpop.xlane.xlu0 %260
    %v262 = vsel %vm62, %v226, 0.0
    %263 = vadd.xlane.f32.xlu0 %v262
    %v264 = vpop.xlane.xlu0 %263
    %v265 = vsel %vm62, %v227, 0.0
    %266 = vadd.xlane.f32.xlu0 %v265
    %v267 = vpop.xlane.xlu0 %266
    %v268 = vsel %vm62, %v228, 0.0
    %269 = vadd.xlane.f32.xlu0 %v268
    %v270 = vpop.xlane.xlu0 %269
    %v271 = vsel %vm62, %v229, 0.0
    %272 = vadd.xlane.f32.xlu0 %v271
    %v273 = vpop.xlane.xlu0 %272
    %v274 = vsel %vm62, %v230, 0.0
    %275 = vadd.xlane.f32.xlu0 %v274
    %v276 = vpop.xlane.xlu0 %275
    %v277 = vsel %vm62, %v231, 0.0
    %278 = vadd.xlane.f32.xlu0 %v277
    %v279 = vpop.xlane.xlu0 %278
    %v280 = vsel %vm62, %v232, 0.0
    %281 = vadd.xlane.f32.xlu0 %v280
    %v282 = vpop.xlane.xlu0 %281
    %v283 = vsel %vm62, %v233, 0.0
    %284 = vadd.xlane.f32.xlu0 %v283
    %v285 = vpop.xlane.xlu0 %284
    %v286 = vsel %vm62, %v234, 0.0
    %287 = vadd.xlane.f32.xlu0 %v286
    %v288 = vpop.xlane.xlu0 %287
    %v289 = vsel %vm62, %v235, 0.0
    %290 = vadd.xlane.f32.xlu0 %v289
    %v291 = vpop.xlane.xlu0 %290
    %v292 = vsel %vm62, %v236, 0.0
    %293 = vadd.xlane.f32.xlu0 %v292
    %v294 = vpop.xlane.xlu0 %293
    %v295 = vsel %vm62, %v237, 0.0
    %296 = vadd.xlane.f32.xlu0 %v295
    %v297 = vpop.xlane.xlu0 %296
    %v298 = vsel %vm62, %v238, 0.0
    %299 = vadd.xlane.f32.xlu0 %v298
    %v300 = vpop.xlane.xlu0 %299
    %v301 = vsel %vm62, %v239, 0.0
    %302 = vadd.xlane.f32.xlu0 %v301
    %v303 = vpop.xlane.xlu0 %302
    %v304 = vsel %vm62, %v240, 0.0
    %305 = vadd.xlane.f32.xlu0 %v304
    %v306 = vpop.xlane.xlu0 %305
    %v307 = vsel %vm62, %v241, 0.0
    %308 = vadd.xlane.f32.xlu0 %v307
    %v309 = vpop.xlane.xlu0 %308
    %v310 = vsel %vm62, %v242, 0.0
    %311 = vadd.xlane.f32.xlu0 %v310
    %v312 = vpop.xlane.xlu0 %311
    %v313 = vsel %vm62, %v243, 0.0
    %314 = vadd.xlane.f32.xlu0 %v313
    %v315 = vpop.xlane.xlu0 %314
    %v316 = vsel %vm62, %v244, 0.0
    %317 = vadd.xlane.f32.xlu0 %v316
    %v318 = vpop.xlane.xlu0 %317
    %v319 = vsel %vm62, %v245, 0.0
    %320 = vadd.xlane.f32.xlu0 %v319
    %v321 = vpop.xlane.xlu0 %320
    %v322 = vsel %vm62, %v246, 0.0
    %323 = vadd.xlane.f32.xlu0 %v322
    %v324 = vpop.xlane.xlu0 %323
    %v325 = vsel %vm62, %v247, 0.0
    %326 = vadd.xlane.f32.xlu0 %v325
    %v327 = vpop.xlane.xlu0 %326
    %v328 = vsel %vm62, %v248, 0.0
    %329 = vadd.xlane.f32.xlu0 %v328
    %v330 = vpop.xlane.xlu0 %329
    %v331 = vsel %vm62, %v249, 0.0
    %332 = vadd.xlane.f32.xlu0 %v331
    %v333 = vpop.xlane.xlu0 %332
    %v334 = vsel %vm62, %v250, 0.0
    %335 = vadd.xlane.f32.xlu0 %v334
    %v336 = vpop.xlane.xlu0 %335
    %v337 = vsel %vm62, %v251, 0.0
    %338 = vadd.xlane.f32.xlu0 %v337
    %v339 = vpop.xlane.xlu0 %338
    %v340 = vsel %vm62, %v252, 0.0
    %341 = vadd.xlane.f32.xlu0 %v340
    %v342 = vpop.xlane.xlu0 %341
    %v343 = vsel %vm62, %v253, 0.0
    %344 = vadd.xlane.f32.xlu0 %v343
    %v345 = vpop.xlane.xlu0 %344
    %v346 = vsel %vm62, %v254, 0.0
    %347 = vadd.xlane.f32.xlu0 %v346
    %v348 = vpop.xlane.xlu0 %347
    %v349 = vsel %vm62, %v255, 0.0
    %350 = vadd.xlane.f32.xlu0 %v349
    %v351 = vpop.xlane.xlu0 %350
    %v352 = vmul.f32 %v258, %v159
    %v353 = vmul.f32 %v261, %v159
    %v354 = vmul.f32 %v264, %v159
    %v355 = vmul.f32 %v267, %v159
    %v356 = vmul.f32 %v270, %v159
    %v357 = vmul.f32 %v273, %v159
    %v358 = vmul.f32 %v276, %v159
    %v359 = vmul.f32 %v279, %v159
    %v360 = vmul.f32 %v282, %v159
    %v361 = vmul.f32 %v285, %v159
    %v362 = vmul.f32 %v288, %v159
    %v363 = vmul.f32 %v291, %v159
    %v364 = vmul.f32 %v294, %v159
    %v365 = vmul.f32 %v297, %v159
    %v366 = vmul.f32 %v300, %v159
    %v367 = vmul.f32 %v303, %v159
    %v368 = vmul.f32 %v306, %v159
    %v369 = vmul.f32 %v309, %v159
    %v370 = vmul.f32 %v312, %v159
    %v371 = vmul.f32 %v315, %v159
    %v372 = vmul.f32 %v318, %v159
    %v373 = vmul.f32 %v321, %v159
    %v374 = vmul.f32 %v324, %v159
    %v375 = vmul.f32 %v327, %v159
    %v376 = vmul.f32 %v330, %v159
    %v377 = vmul.f32 %v333, %v159
    %v378 = vmul.f32 %v336, %v159
    %v379 = vmul.f32 %v339, %v159
    %v380 = vmul.f32 %v342, %v159
    %v381 = vmul.f32 %v345, %v159
    %v382 = vmul.f32 %v348, %v159
    %v383 = vmul.f32 %v351, %v159
    %v384 = vadd.f32 %v352, 1e-05
    %v385 = vadd.f32 %v353, 1e-05
    %v386 = vadd.f32 %v354, 1e-05
    %v387 = vadd.f32 %v355, 1e-05
    %v388 = vadd.f32 %v356, 1e-05
    %v389 = vadd.f32 %v357, 1e-05
    %v390 = vadd.f32 %v358, 1e-05
    %v391 = vadd.f32 %v359, 1e-05
    %v392 = vadd.f32 %v360, 1e-05
    %v393 = vadd.f32 %v361, 1e-05
    %v394 = vadd.f32 %v362, 1e-05
    %v395 = vadd.f32 %v363, 1e-05
    %v396 = vadd.f32 %v364, 1e-05
    %v397 = vadd.f32 %v365, 1e-05
    %v398 = vadd.f32 %v366, 1e-05
    %v399 = vadd.f32 %v367, 1e-05
    %v400 = vadd.f32 %v368, 1e-05
    %v401 = vadd.f32 %v369, 1e-05
    %v402 = vadd.f32 %v370, 1e-05
    %v403 = vadd.f32 %v371, 1e-05
    %v404 = vadd.f32 %v372, 1e-05
    %v405 = vadd.f32 %v373, 1e-05
    %v406 = vadd.f32 %v374, 1e-05
    %v407 = vadd.f32 %v375, 1e-05
    %v408 = vadd.f32 %v376, 1e-05
    %v409 = vadd.f32 %v377, 1e-05
    %v410 = vadd.f32 %v378, 1e-05
    %v411 = vadd.f32 %v379, 1e-05
    %v412 = vadd.f32 %v380, 1e-05
    %v413 = vadd.f32 %v381, 1e-05
    %v414 = vadd.f32 %v382, 1e-05
    %v415 = vadd.f32 %v383, 1e-05
    %v416 = vrsqrt.pop %v384
    %v417 = vrsqrt.pop %v385
    %v418 = vrsqrt.pop %v386
    %v419 = vrsqrt.pop %v387
    %v420 = vrsqrt.pop %v388
    %v421 = vrsqrt.pop %v389
    %v422 = vrsqrt.pop %v390
    %v423 = vrsqrt.pop %v391
    %v424 = vrsqrt.pop %v392
    %v425 = vrsqrt.pop %v393
    %v426 = vrsqrt.pop %v394
    %v427 = vrsqrt.pop %v395
    %v428 = vrsqrt.pop %v396
    %v429 = vrsqrt.pop %v397
    %v430 = vrsqrt.pop %v398
    %v431 = vrsqrt.pop %v399
    %v432 = vrsqrt.pop %v400
    %v433 = vrsqrt.pop %v401
    %v434 = vrsqrt.pop %v402
    %v435 = vrsqrt.pop %v403
    %v436 = vrsqrt.pop %v404
    %v437 = vrsqrt.pop %v405
    %v438 = vrsqrt.pop %v406
    %v439 = vrsqrt.pop %v407
    %v440 = vrsqrt.pop %v408
    %v441 = vrsqrt.pop %v409
    %v442 = vrsqrt.pop %v410
    %v443 = vrsqrt.pop %v411
    %v444 = vrsqrt.pop %v412
    %v445 = vrsqrt.pop %v413
    %v446 = vrsqrt.pop %v414
    %v447 = vrsqrt.pop %v415
    %v448 = vmul.f32 %v192, %v416
    %v449 = vmul.f32 %v193, %v417
    %v450 = vmul.f32 %v194, %v418
    %v451 = vmul.f32 %v195, %v419
    %v452 = vmul.f32 %v196, %v420
    %v453 = vmul.f32 %v197, %v421
    %v454 = vmul.f32 %v198, %v422
    %v455 = vmul.f32 %v199, %v423
    %v456 = vmul.f32 %v200, %v424
    %v457 = vmul.f32 %v201, %v425
    %v458 = vmul.f32 %v202, %v426
    %v459 = vmul.f32 %v203, %v427
    %v460 = vmul.f32 %v204, %v428
    %v461 = vmul.f32 %v205, %v429
    %v462 = vmul.f32 %v206, %v430
    %v463 = vmul.f32 %v207, %v431
    %v464 = vmul.f32 %v208, %v432
    %v465 = vmul.f32 %v209, %v433
    %v466 = vmul.f32 %v210, %v434
    %v467 = vmul.f32 %v211, %v435
    %v468 = vmul.f32 %v212, %v436
    %v469 = vmul.f32 %v213, %v437
    %v470 = vmul.f32 %v214, %v438
    %v471 = vmul.f32 %v215, %v439
    %v472 = vmul.f32 %v216, %v440
    %v473 = vmul.f32 %v217, %v441
    %v474 = vmul.f32 %v218, %v442
    %v475 = vmul.f32 %v219, %v443
    %v476 = vmul.f32 %v220, %v444
    %v477 = vmul.f32 %v221, %v445
    %v478 = vmul.f32 %v222, %v446
    %v479 = vmul.f32 %v223, %v447
    %v480 = vld [vmem:[%s1] sm:$0x1]
    %v482 = vlaneseq
    %v483 = vshrl.u32 %v482, 7
    %v484 = vsub.s32 0, %v483
    %v485 = vrot.slane %v480, %v484
    %v487 = vmul.f32 %v448, %v485
    %v488 = vmul.f32 %v449, %v485
    %v489 = vmul.f32 %v450, %v485
    %v490 = vmul.f32 %v451, %v485
    %v491 = vmul.f32 %v452, %v485
    %v492 = vmul.f32 %v453, %v485
    %v493 = vmul.f32 %v454, %v485
    %v494 = vmul.f32 %v455, %v485
    %v495 = vmul.f32 %v456, %v485
    %v496 = vmul.f32 %v457, %v485
    %v497 = vmul.f32 %v458, %v485
    %v498 = vmul.f32 %v459, %v485
    %v499 = vmul.f32 %v460, %v485
    %v500 = vmul.f32 %v461, %v485
    %v501 = vmul.f32 %v462, %v485
    %v502 = vmul.f32 %v463, %v485
    %v503 = vmul.f32 %v464, %v485
    %v504 = vmul.f32 %v465, %v485
    %v505 = vmul.f32 %v466, %v485
    %v506 = vmul.f32 %v467, %v485
    %v507 = vmul.f32 %v468, %v485
    %v508 = vmul.f32 %v469, %v485
    %v509 = vmul.f32 %v470, %v485
    %v510 = vmul.f32 %v471, %v485
    %v511 = vmul.f32 %v472, %v485
    %v512 = vmul.f32 %v473, %v485
    %v513 = vmul.f32 %v474, %v485
    %v514 = vmul.f32 %v475, %v485
    %v515 = vmul.f32 %v476, %v485
    %v516 = vmul.f32 %v477, %v485
    %v517 = vmul.f32 %v478, %v485
    %v518 = vmul.f32 %v479, %v485
    %v519 = vld [vmem:[%s2] sm:$0x1]
    %v521 = vlaneseq
    %v522 = vshrl.u32 %v521, 7
    %v523 = vsub.s32 0, %v522
    %v524 = vrot.slane %v519, %v523
    %v526 = vadd.f32 %v487, %v524
    %v527 = vadd.f32 %v488, %v524
    %v528 = vadd.f32 %v489, %v524
    %v529 = vadd.f32 %v490, %v524
    %v530 = vadd.f32 %v491, %v524
    %v531 = vadd.f32 %v492, %v524
    %v532 = vadd.f32 %v493, %v524
    %v533 = vadd.f32 %v494, %v524
    %v534 = vadd.f32 %v495, %v524
    %v535 = vadd.f32 %v496, %v524
    %v536 = vadd.f32 %v497, %v524
    %v537 = vadd.f32 %v498, %v524
    %v538 = vadd.f32 %v499, %v524
    %v539 = vadd.f32 %v500, %v524
    %v540 = vadd.f32 %v501, %v524
    %v541 = vadd.f32 %v502, %v524
    %v542 = vadd.f32 %v503, %v524
    %v543 = vadd.f32 %v504, %v524
    %v544 = vadd.f32 %v505, %v524
    %v545 = vadd.f32 %v506, %v524
    %v546 = vadd.f32 %v507, %v524
    %v547 = vadd.f32 %v508, %v524
    %v548 = vadd.f32 %v509, %v524
    %v549 = vadd.f32 %v510, %v524
    %v550 = vadd.f32 %v511, %v524
    %v551 = vadd.f32 %v512, %v524
    %v552 = vadd.f32 %v513, %v524
    %v553 = vadd.f32 %v514, %v524
    %v554 = vadd.f32 %v515, %v524
    %v555 = vadd.f32 %v516, %v524
    %v556 = vadd.f32 %v517, %v524
    %v557 = vadd.f32 %v518, %v524
    %558 = vst.msk [vmem:[#allocation2] sm:$0xff] %vm62, %v526
    %559 = vst.msk [vmem:[#allocation2 + $0x8] sm:$0xff] %vm62, %v527
    %560 = vst.msk [vmem:[#allocation2 + $0x10] sm:$0xff] %vm62, %v528
    %561 = vst.msk [vmem:[#allocation2 + $0x18] sm:$0xff] %vm62, %v529
    %562 = vst.msk [vmem:[#allocation2 + $0x20] sm:$0xff] %vm62, %v530
    %563 = vst.msk [vmem:[#allocation2 + $0x28] sm:$0xff] %vm62, %v531
    %564 = vst.msk [vmem:[#allocation2 + $0x30] sm:$0xff] %vm62, %v532
    %565 = vst.msk [vmem:[#allocation2 + $0x38] sm:$0xff] %vm62, %v533
    %566 = vst.msk [vmem:[#allocation2 + $0x40] sm:$0xff] %vm62, %v534
    %567 = vst.msk [vmem:[#allocation2 + $0x48] sm:$0xff] %vm62, %v535
    %568 = vst.msk [vmem:[#allocation2 + $0x50] sm:$0xff] %vm62, %v536
    %569 = vst.msk [vmem:[#allocation2 + $0x58] sm:$0xff] %vm62, %v537
    %570 = vst.msk [vmem:[#allocation2 + $0x60] sm:$0xff] %vm62, %v538
    %571 = vst.msk [vmem:[#allocation2 + $0x68] sm:$0xff] %vm62, %v539
    %572 = vst.msk [vmem:[#allocation2 + $0x70] sm:$0xff] %vm62, %v540
    %573 = vst.msk [vmem:[#allocation2 + $0x78] sm:$0xff] %vm62, %v541
    %574 = vst.msk [vmem:[#allocation2 + $0x80] sm:$0xff] %vm62, %v542
    %575 = vst.msk [vmem:[#allocation2 + $0x88] sm:$0xff] %vm62, %v543
    %576 = vst.msk [vmem:[#allocation2 + $0x90] sm:$0xff] %vm62, %v544
    %577 = vst.msk [vmem:[#allocation2 + $0x98] sm:$0xff] %vm62, %v545
    %578 = vst.msk [vmem:[#allocation2 + $0xa0] sm:$0xff] %vm62, %v546
    %579 = vst.msk [vmem:[#allocation2 + $0xa8] sm:$0xff] %vm62, %v547
    %580 = vst.msk [vmem:[#allocation2 + $0xb0] sm:$0xff] %vm62, %v548
    %581 = vst.msk [vmem:[#allocation2 + $0xb8] sm:$0xff] %vm62, %v549
    %582 = vst.msk [vmem:[#allocation2 + $0xc0] sm:$0xff] %vm62, %v550
    %583 = vst.msk [vmem:[#allocation2 + $0xc8] sm:$0xff] %vm62, %v551
    %584 = vst.msk [vmem:[#allocation2 + $0xd0] sm:$0xff] %vm62, %v552
    %585 = vst.msk [vmem:[#allocation2 + $0xd8] sm:$0xff] %vm62, %v553
    %586 = vst.msk [vmem:[#allocation2 + $0xe0] sm:$0xff] %vm62, %v554
    %587 = vst.msk [vmem:[#allocation2 + $0xe8] sm:$0xff] %vm62, %v555
    %588 = vst.msk [vmem:[#allocation2 + $0xf0] sm:$0xff] %vm62, %v556
    %589 = vst.msk [vmem:[#allocation2 + $0xf8] sm:$0xff] %vm62, %v557
    %590 = vst.msk [vmem:[#allocation3] sm:$0xff] %vm62, 0.0
    %591 = vst.msk [vmem:[#allocation3 + $0x8] sm:$0xff] %vm62, 0.0
    %592 = vst.msk [vmem:[#allocation3 + $0x10] sm:$0xff] %vm62, 0.0
    %593 = vst.msk [vmem:[#allocation3 + $0x18] sm:$0xff] %vm62, 0.0
    %594 = vst.msk [vmem:[#allocation3 + $0x20] sm:$0xff] %vm62, 0.0
    %595 = vst.msk [vmem:[#allocation3 + $0x28] sm:$0xff] %vm62, 0.0
    %596 = vst.msk [vmem:[#allocation3 + $0x30] sm:$0xff] %vm62, 0.0
    %597 = vst.msk [vmem:[#allocation3 + $0x38] sm:$0xff] %vm62, 0.0
    %598 = vst.msk [vmem:[#allocation3 + $0x40] sm:$0xff] %vm62, 0.0
    %599 = vst.msk [vmem:[#allocation3 + $0x48] sm:$0xff] %vm62, 0.0
    %600 = vst.msk [vmem:[#allocation3 + $0x50] sm:$0xff] %vm62, 0.0
    %601 = vst.msk [vmem:[#allocation3 + $0x58] sm:$0xff] %vm62, 0.0
    %602 = vst.msk [vmem:[#allocation3 + $0x60] sm:$0xff] %vm62, 0.0
    %603 = vst.msk [vmem:[#allocation3 + $0x68] sm:$0xff] %vm62, 0.0
    %604 = vst.msk [vmem:[#allocation3 + $0x70] sm:$0xff] %vm62, 0.0
    %605 = vst.msk [vmem:[#allocation3 + $0x78] sm:$0xff] %vm62, 0.0
    %606 = vst.msk [vmem:[#allocation3 + $0x80] sm:$0xff] %vm62, 0.0
    %607 = vst.msk [vmem:[#allocation3 + $0x88] sm:$0xff] %vm62, 0.0
    %608 = vst.msk [vmem:[#allocation3 + $0x90] sm:$0xff] %vm62, 0.0
    %609 = vst.msk [vmem:[#allocation3 + $0x98] sm:$0xff] %vm62, 0.0
    %610 = vst.msk [vmem:[#allocation3 + $0xa0] sm:$0xff] %vm62, 0.0
    %611 = vst.msk [vmem:[#allocation3 + $0xa8] sm:$0xff] %vm62, 0.0
    %612 = vst.msk [vmem:[#allocation3 + $0xb0] sm:$0xff] %vm62, 0.0
    %613 = vst.msk [vmem:[#allocation3 + $0xb8] sm:$0xff] %vm62, 0.0
    %614 = vst.msk [vmem:[#allocation3 + $0xc0] sm:$0xff] %vm62, 0.0
    %615 = vst.msk [vmem:[#allocation3 + $0xc8] sm:$0xff] %vm62, 0.0
    %616 = vst.msk [vmem:[#allocation3 + $0xd0] sm:$0xff] %vm62, 0.0
    %617 = vst.msk [vmem:[#allocation3 + $0xd8] sm:$0xff] %vm62, 0.0
    %618 = vst.msk [vmem:[#allocation3 + $0xe0] sm:$0xff] %vm62, 0.0
    %619 = vst.msk [vmem:[#allocation3 + $0xe8] sm:$0xff] %vm62, 0.0
    %620 = vst.msk [vmem:[#allocation3 + $0xf0] sm:$0xff] %vm62, 0.0
    %621 = vst.msk [vmem:[#allocation3 + $0xf8] sm:$0xff] %vm62, 0.0
  $region33: #{tpu_custom_call.1} parent=0 // pred_fallthru
    _
  %v622 = vld [vmem:[#allocation2] sm:$0xff]
  %v623 = vld [vmem:[#allocation2 + $0x8] sm:$0xff]
  %v624 = vld [vmem:[#allocation2 + $0x10] sm:$0xff]
  %v625 = vld [vmem:[#allocation2 + $0x18] sm:$0xff]
  %v626 = vld [vmem:[#allocation2 + $0x20] sm:$0xff]
  %v627 = vld [vmem:[#allocation2 + $0x28] sm:$0xff]
  %v628 = vld [vmem:[#allocation2 + $0x30] sm:$0xff]
  %v629 = vld [vmem:[#allocation2 + $0x38] sm:$0xff]
  %v630 = vld [vmem:[#allocation2 + $0x40] sm:$0xff]
  %v631 = vld [vmem:[#allocation2 + $0x48] sm:$0xff]
  %v632 = vld [vmem:[#allocation2 + $0x50] sm:$0xff]
  %v633 = vld [vmem:[#allocation2 + $0x58] sm:$0xff]
  %v634 = vld [vmem:[#allocation2 + $0x60] sm:$0xff]
  %v635 = vld [vmem:[#allocation2 + $0x68] sm:$0xff]
  %v636 = vld [vmem:[#allocation2 + $0x70] sm:$0xff]
  %v637 = vld [vmem:[#allocation2 + $0x78] sm:$0xff]
  %v638 = vld [vmem:[#allocation2 + $0x80] sm:$0xff]
  %v639 = vld [vmem:[#allocation2 + $0x88] sm:$0xff]
  %v640 = vld [vmem:[#allocation2 + $0x90] sm:$0xff]
  %v641 = vld [vmem:[#allocation2 + $0x98] sm:$0xff]
  %v642 = vld [vmem:[#allocation2 + $0xa0] sm:$0xff]
  %v643 = vld [vmem:[#allocation2 + $0xa8] sm:$0xff]
  %v644 = vld [vmem:[#allocation2 + $0xb0] sm:$0xff]
  %v645 = vld [vmem:[#allocation2 + $0xb8] sm:$0xff]
  %v646 = vld [vmem:[#allocation2 + $0xc0] sm:$0xff]
  %v647 = vld [vmem:[#allocation2 + $0xc8] sm:$0xff]
  %v648 = vld [vmem:[#allocation2 + $0xd0] sm:$0xff]
  %v649 = vld [vmem:[#allocation2 + $0xd8] sm:$0xff]
  %v650 = vld [vmem:[#allocation2 + $0xe0] sm:$0xff]
  %v651 = vld [vmem:[#allocation2 + $0xe8] sm:$0xff]
  %v652 = vld [vmem:[#allocation2 + $0xf0] sm:$0xff]
  %v653 = vld [vmem:[#allocation2 + $0xf8] sm:$0xff]
  %v654 = vld [vmem:[%s3] sm:$0xff]
  %v655 = vld [vmem:[%s3 + $0x8] sm:$0xff]
  %v656 = vld [vmem:[%s3 + $0x10] sm:$0xff]
  %v657 = vld [vmem:[%s3 + $0x18] sm:$0xff]
  %v658 = vld [vmem:[%s4] sm:$0x1]
  %v660 = vlaneseq
  %v661 = vshrl.u32 %v660, 7
  %v662 = vsub.s32 0, %v661
  %v663 = vrot.slane %v658, %v662
  %vm665 = vcmask 261120
  %v667 = vsel %vm665, %v622, 0
  %v670 = vsel %vm665, %v623, 0
  %v673 = vsel %vm665, %v624, 0
  %v676 = vsel %vm665, %v625, 0
  %v679 = vsel %vm665, %v626, 0
  %v682 = vsel %vm665, %v627, 0
  %v685 = vsel %vm665, %v628, 0
  %v688 = vsel %vm665, %v629, 0
  %v691 = vsel %vm665, %v630, 0
  %v694 = vsel %vm665, %v631, 0
  %v697 = vsel %vm665, %v632, 0
  %v700 = vsel %vm665, %v633, 0
  %v703 = vsel %vm665, %v634, 0
  %v706 = vsel %vm665, %v635, 0
  %v709 = vsel %vm665, %v636, 0
  %v712 = vsel %vm665, %v637, 0
  %v715 = vsel %vm665, %v638, 0
  %v718 = vsel %vm665, %v639, 0
  %v721 = vsel %vm665, %v640, 0
  %v724 = vsel %vm665, %v641, 0
  %v727 = vsel %vm665, %v642, 0
  %v730 = vsel %vm665, %v643, 0
  %v733 = vsel %vm665, %v644, 0
  %v736 = vsel %vm665, %v645, 0
  %v739 = vsel %vm665, %v646, 0
  %v742 = vsel %vm665, %v647, 0
  %v745 = vsel %vm665, %v648, 0
  %v748 = vsel %vm665, %v649, 0
  %v751 = vsel %vm665, %v650, 0
  %v754 = vsel %vm665, %v651, 0
  %v757 = vsel %vm665, %v652, 0
  %v760 = vsel %vm665, %v653, 0
  %762 = vmatprep.subr.mxu0 0.0
  %763 = vmatpush1.msra.mxu0 %v654
  %764 = vmatprep.subr.mxu0 0.0
  %765 = vmatpush1.msra.mxu0 %v655
  %766 = vmatprep.subr.mxu0 0.0
  %767 = vmatpush1.msra.mxu0 %v656
  %768 = vmatprep.subr.mxu0 0.0
  %769 = vmatpush1.msra.mxu0 %v657
  %770 = vmatprep.subr.mxu0 0.0
  %771 = vmatpush1.msra.mxu0 0.0
  %772 = vmatprep.subr.mxu0 0.0
  %773 = vmatpush1.msra.mxu0 0.0
  %774 = vmatprep.subr.mxu0 0.0
  %775 = vmatpush1.msra.mxu0 0.0
  %776 = vmatprep.subr.mxu0 0.0
  %777 = vmatpush1.msra.mxu0 0.0
  %778 = vmatprep.subr.mxu0 0.0
  %779 = vmatpush1.msra.mxu0 0.0
  %780 = vmatprep.subr.mxu0 0.0
  %781 = vmatpush1.msra.mxu0 0.0
  %782 = vmatprep.subr.mxu0 0.0
  %783 = vmatpush1.msra.mxu0 0.0
  %784 = vmatprep.subr.mxu0 0.0
  %785 = vmatpush1.msra.mxu0 0.0
  %786 = vmatprep.subr.mxu0 0.0
  %787 = vmatpush1.msra.mxu0 0.0
  %788 = vmatprep.subr.mxu0 0.0
  %789 = vmatpush1.msra.mxu0 0.0
  %790 = vmatprep.subr.mxu0 0.0
  %791 = vmatpush1.msra.mxu0 0.0
  %792 = vmatprep.subr.mxu0 0.0
  %793 = vmatpush1.msra.mxu0 0.0
  %794 = vmatprep.subr.mxu0 0.0
  %795 = vmatpush1.msra.mxu0 0.0
  %796 = vmatprep.subr.mxu0 0.0
  %797 = vmatpush1.msra.mxu0 0.0
  %798 = vmatprep.subr.mxu0 0.0
  %799 = vmatpush1.msra.mxu0 0.0
  %800 = vmatprep.subr.mxu0 0.0
  %801 = vmatpush1.msra.mxu0 0.0
  %802 = vmatprep.subr.mxu0 0.0
  %803 = vmatpush1.msra.mxu0 0.0
  %804 = vmatprep.subr.mxu0 0.0
  %805 = vmatpush1.msra.mxu0 0.0
  %806 = vmatprep.subr.mxu0 0.0
  %807 = vmatpush1.msra.mxu0 0.0
  %808 = vmatprep.subr.mxu0 0.0
  %809 = vmatpush1.msra.mxu0 0.0
  %810 = vmatprep.subr.mxu0 0.0
  %811 = vmatpush1.msra.mxu0 0.0
  %812 = vmatprep.subr.mxu0 0.0
  %813 = vmatpush1.msra.mxu0 0.0
  %814 = vmatprep.subr.mxu0 0.0
  %815 = vmatpush1.msra.mxu0 0.0
  %816 = vmatprep.subr.mxu0 0.0
  %817 = vmatpush1.msra.mxu0 0.0
  %818 = vmatprep.subr.mxu0 0.0
  %819 = vmatpush1.msra.mxu0 0.0
  %820 = vmatprep.subr.mxu0 0.0
  %821 = vmatpush1.msra.mxu0 0.0
  %822 = vmatprep.subr.mxu0 0.0
  %823 = vmatpush1.msra.mxu0 0.0
  %824 = vmatprep.subr.mxu0 0.0
  %825 = vmatpush1.msra.mxu0 0.0
  %826 = vmatprep.mubr.f32.mxu0 0.0
  %827 = vmatmul.mubr.f32.gmra.mrb[0].mxu0 %v667
  %v828 = vpop.f32.mrb[0].mxu0
  %v829 = vadd.f32 %v663, %v828
  %v830 = vpop.f32.mrb[0].mxu0
  %831 = vmatprep.mubr.f32.mxu0 0.0
  %832 = vmatmul.mubr.f32.gmra.mrb[0].mxu0 %v670
  %v833 = vpop.f32.mrb[0].mxu0
  %v834 = vadd.f32 %v663, %v833
  %v835 = vpop.f32.mrb[0].mxu0
  %836 = vmatprep.mubr.f32.mxu0 0.0
  %837 = vmatmul.mubr.f32.gmra.mrb[0].mxu0 %v673
  %v838 = vpop.f32.mrb[0].mxu0
  %v839 = vadd.f32 %v663, %v838
  %v840 = vpop.f32.mrb[0].mxu0
  %841 = vmatprep.mubr.f32.mxu0 0.0
  %842 = vmatmul.mubr.f32.gmra.mrb[0].mxu0 %v676
  %v843 = vpop.f32.mrb[0].mxu0
  %v844 = vadd.f32 %v663, %v843
  %v845 = vpop.f32.mrb[0].mxu0
  %846 = vmatprep.mubr.f32.mxu0 0.0
  %847 = vmatmul.mubr.f32.gmra.mrb[0].mxu0 %v679
  %v848 = vpop.f32.mrb[0].mxu0
  %v849 = vadd.f32 %v663, %v848
  %v850 = vpop.f32.mrb[0].mxu0
  %851 = vmatprep.mubr.f32.mxu0 0.0
  %852 = vmatmul.mubr.f32.gmra.mrb[0].mxu0 %v682
  %v853 = vpop.f32.mrb[0].mxu0
  %v854 = vadd.f32 %v663, %v853
  %v855 = vpop.f32.mrb[0].mxu0
  %856 = vmatprep.mubr.f32.mxu0 0.0
  %857 = vmatmul.mubr.f32.gmra.mrb[0].mxu0 %v685
  %v858 = vpop.f32.mrb[0].mxu0
  %v859 = vadd.f32 %v663, %v858
  %v860 = vpop.f32.mrb[0].mxu0
  %861 = vmatprep.mubr.f32.mxu0 0.0
  %862 = vmatmul.mubr.f32.gmra.mrb[0].mxu0 %v688
  %v863 = vpop.f32.mrb[0].mxu0
  %v864 = vadd.f32 %v663, %v863
  %v865 = vpop.f32.mrb[0].mxu0
  %866 = vmatprep.mubr.f32.mxu0 0.0
  %867 = vmatmul.mubr.f32.gmra.mrb[0].mxu0 %v691
  %v868 = vpop.f32.mrb[0].mxu0
  %v869 = vadd.f32 %v663, %v868
  %v870 = vpop.f32.mrb[0].mxu0
  %871 = vmatprep.mubr.f32.mxu0 0.0
  %872 = vmatmul.mubr.f32.gmra.mrb[0].mxu0 %v694
  %v873 = vpop.f32.mrb[0].mxu0
  %v874 = vadd.f32 %v663, %v873
  %v875 = vpop.f32.mrb[0].mxu0
  %876 = vmatprep.mubr.f32.mxu0 0.0
  %877 = vmatmul.mubr.f32.gmra.mrb[0].mxu0 %v697
  %v878 = vpop.f32.mrb[0].mxu0
  %v879 = vadd.f32 %v663, %v878
  %v880 = vpop.f32.mrb[0].mxu0
  %881 = vmatprep.mubr.f32.mxu0 0.0
  %882 = vmatmul.mubr.f32.gmra.mrb[0].mxu0 %v700
  %v883 = vpop.f32.mrb[0].mxu0
  %v884 = vadd.f32 %v663, %v883
  %v885 = vpop.f32.mrb[0].mxu0
  %886 = vmatprep.mubr.f32.mxu0 0.0
  %887 = vmatmul.mubr.f32.gmra.mrb[0].mxu0 %v703
  %v888 = vpop.f32.mrb[0].mxu0
  %v889 = vadd.f32 %v663, %v888
  %v890 = vpop.f32.mrb[0].mxu0
  %891 = vmatprep.mubr.f32.mxu0 0.0
  %892 = vmatmul.mubr.f32.gmra.mrb[0].mxu0 %v706
  %v893 = vpop.f32.mrb[0].mxu0
  %v894 = vadd.f32 %v663, %v893
  %v895 = vpop.f32.mrb[0].mxu0
  %896 = vmatprep.mubr.f32.mxu0 0.0
  %897 = vmatmul.mubr.f32.gmra.mrb[0].mxu0 %v709
  %v898 = vpop.f32.mrb[0].mxu0
  %v899 = vadd.f32 %v663, %v898
  %v900 = vpop.f32.mrb[0].mxu0
  %901 = vmatprep.mubr.f32.mxu0 0.0
  %902 = vmatmul.mubr.f32.gmra.mrb[0].mxu0 %v712
  %v903 = vpop.f32.mrb[0].mxu0
  %v904 = vadd.f32 %v663, %v903
  %v905 = vpop.f32.mrb[0].mxu0
  %906 = vmatprep.mubr.f32.mxu0 0.0
  %907 = vmatmul.mubr.f32.gmra.mrb[0].mxu0 %v715
  %v908 = vpop.f32.mrb[0].mxu0
  %v909 = vadd.f32 %v663, %v908
  %v910 = vpop.f32.mrb[0].mxu0
  %911 = vmatprep.mubr.f32.mxu0 0.0
  %912 = vmatmul.mubr.f32.gmra.mrb[0].mxu0 %v718
  %v913 = vpop.f32.mrb[0].mxu0
  %v914 = vadd.f32 %v663, %v913
  %v915 = vpop.f32.mrb[0].mxu0
  %916 = vmatprep.mubr.f32.mxu0 0.0
  %917 = vmatmul.mubr.f32.gmra.mrb[0].mxu0 %v721
  %v918 = vpop.f32.mrb[0].mxu0
  %v919 = vadd.f32 %v663, %v918
  %v920 = vpop.f32.mrb[0].mxu0
  %921 = vmatprep.mubr.f32.mxu0 0.0
  %922 = vmatmul.mubr.f32.gmra.mrb[0].mxu0 %v724
  %v923 = vpop.f32.mrb[0].mxu0
  %v924 = vadd.f32 %v663, %v923
  %v925 = vpop.f32.mrb[0].mxu0
  %926 = vmatprep.mubr.f32.mxu0 0.0
  %927 = vmatmul.mubr.f32.gmra.mrb[0].mxu0 %v727
  %v928 = vpop.f32.mrb[0].mxu0
  %v929 = vadd.f32 %v663, %v928
  %v930 = vpop.f32.mrb[0].mxu0
  %931 = vmatprep.mubr.f32.mxu0 0.0
  %932 = vmatmul.mubr.f32.gmra.mrb[0].mxu0 %v730
  %v933 = vpop.f32.mrb[0].mxu0
  %v934 = vadd.f32 %v663, %v933
  %v935 = vpop.f32.mrb[0].mxu0
  %936 = vmatprep.mubr.f32.mxu0 0.0
  %937 = vmatmul.mubr.f32.gmra.mrb[0].mxu0 %v733
  %v938 = vpop.f32.mrb[0].mxu0
  %v939 = vadd.f32 %v663, %v938
  %v940 = vpop.f32.mrb[0].mxu0
  %941 = vmatprep.mubr.f32.mxu0 0.0
  %942 = vmatmul.mubr.f32.gmra.mrb[0].mxu0 %v736
  %v943 = vpop.f32.mrb[0].mxu0
  %v944 = vadd.f32 %v663, %v943
  %v945 = vpop.f32.mrb[0].mxu0
  %946 = vmatprep.mubr.f32.mxu0 0.0
  %947 = vmatmul.mubr.f32.gmra.mrb[0].mxu0 %v739
  %v948 = vpop.f32.mrb[0].mxu0
  %v949 = vadd.f32 %v663, %v948
  %v950 = vpop.f32.mrb[0].mxu0
  %951 = vmatprep.mubr.f32.mxu0 0.0
  %952 = vmatmul.mubr.f32.gmra.mrb[0].mxu0 %v742
  %v953 = vpop.f32.mrb[0].mxu0
  %v954 = vadd.f32 %v663, %v953
  %v955 = vpop.f32.mrb[0].mxu0
  %956 = vmatprep.mubr.f32.mxu0 0.0
  %957 = vmatmul.mubr.f32.gmra.mrb[0].mxu0 %v745
  %v958 = vpop.f32.mrb[0].mxu0
  %v959 = vadd.f32 %v663, %v958
  %v960 = vpop.f32.mrb[0].mxu0
  %961 = vmatprep.mubr.f32.mxu0 0.0
  %962 = vmatmul.mubr.f32.gmra.mrb[0].mxu0 %v748
  %v963 = vpop.f32.mrb[0].mxu0
  %v964 = vadd.f32 %v663, %v963
  %v965 = vpop.f32.mrb[0].mxu0
  %966 = vmatprep.mubr.f32.mxu0 0.0
  %967 = vmatmul.mubr.f32.gmra.mrb[0].mxu0 %v751
  %v968 = vpop.f32.mrb[0].mxu0
  %v969 = vadd.f32 %v663, %v968
  %v970 = vpop.f32.mrb[0].mxu0
  %971 = vmatprep.mubr.f32.mxu0 0.0
  %972 = vmatmul.mubr.f32.gmra.mrb[0].mxu0 %v754
  %v973 = vpop.f32.mrb[0].mxu0
  %v974 = vadd.f32 %v663, %v973
  %v975 = vpop.f32.mrb[0].mxu0
  %976 = vmatprep.mubr.f32.mxu0 0.0
  %977 = vmatmul.mubr.f32.gmra.mrb[0].mxu0 %v757
  %v978 = vpop.f32.mrb[0].mxu0
  %v979 = vadd.f32 %v663, %v978
  %v980 = vpop.f32.mrb[0].mxu0
  %981 = vmatprep.mubr.f32.mxu0 0.0
  %982 = vmatmul.mubr.f32.gmra.mrb[0].mxu0 %v760
  %v983 = vpop.f32.mrb[0].mxu0
  %v984 = vadd.f32 %v663, %v983
  %v985 = vpop.f32.mrb[0].mxu0
  %986 = vdwg.mxu0
  %v987 = vxor.u32 %v829, 2147483648
  %v988 = vxor.u32 %v834, 2147483648
  %v989 = vxor.u32 %v839, 2147483648
  %v990 = vxor.u32 %v844, 2147483648
  %v991 = vxor.u32 %v849, 2147483648
  %v992 = vxor.u32 %v854, 2147483648
  %v993 = vxor.u32 %v859, 2147483648
  %v994 = vxor.u32 %v864, 2147483648
  %v995 = vxor.u32 %v869, 2147483648
  %v996 = vxor.u32 %v874, 2147483648
  %v997 = vxor.u32 %v879, 2147483648
  %v998 = vxor.u32 %v884, 2147483648
  %v999 = vxor.u32 %v889, 2147483648
  %v1000 = vxor.u32 %v894, 2147483648
  %v1001 = vxor.u32 %v899, 2147483648
  %v1002 = vxor.u32 %v904, 2147483648
  %v1003 = vxor.u32 %v909, 2147483648
  %v1004 = vxor.u32 %v914, 2147483648
  %v1005 = vxor.u32 %v919, 2147483648
  %v1006 = vxor.u32 %v924, 2147483648
  %v1007 = vxor.u32 %v929, 2147483648
  %v1008 = vxor.u32 %v934, 2147483648
  %v1009 = vxor.u32 %v939, 2147483648
  %v1010 = vxor.u32 %v944, 2147483648
  %v1011 = vxor.u32 %v949, 2147483648
  %v1012 = vxor.u32 %v954, 2147483648
  %v1013 = vxor.u32 %v959, 2147483648
  %v1014 = vxor.u32 %v964, 2147483648
  %v1015 = vxor.u32 %v969, 2147483648
  %v1016 = vxor.u32 %v974, 2147483648
  %v1017 = vxor.u32 %v979, 2147483648
  %v1018 = vxor.u32 %v984, 2147483648
  %v1019 = vmul.f32 %v987, 1.442695
  %v1020 = vpow.pop %v1019
  %v1021 = vmul.f32 %v988, 1.442695
  %v1022 = vpow.pop %v1021
  %v1023 = vmul.f32 %v989, 1.442695
  %v1024 = vpow.pop %v1023
  %v1025 = vmul.f32 %v990, 1.442695
  %v1026 = vpow.pop %v1025
  %v1027 = vmul.f32 %v991, 1.442695
  %v1028 = vpow.pop %v1027
  %v1029 = vmul.f32 %v992, 1.442695
  %v1030 = vpow.pop %v1029
  %v1031 = vmul.f32 %v993, 1.442695
  %v1032 = vpow.pop %v1031
  %v1033 = vmul.f32 %v994, 1.442695
  %v1034 = vpow.pop %v1033
  %v1035 = vmul.f32 %v995, 1.442695
  %v1036 = vpow.pop %v1035
  %v1037 = vmul.f32 %v996, 1.442695
  %v1038 = vpow.pop %v1037
  %v1039 = vmul.f32 %v997, 1.442695
  %v1040 = vpow.pop %v1039
  %v1041 = vmul.f32 %v998, 1.442695
  %v1042 = vpow.pop %v1041
  %v1043 = vmul.f32 %v999, 1.442695
  %v1044 = vpow.pop %v1043
  %v1045 = vmul.f32 %v1000, 1.442695
  %v1046 = vpow.pop %v1045
  %v1047 = vmul.f32 %v1001, 1.442695
  %v1048 = vpow.pop %v1047
  %v1049 = vmul.f32 %v1002, 1.442695
  %v1050 = vpow.pop %v1049
  %v1051 = vmul.f32 %v1003, 1.442695
  %v1052 = vpow.pop %v1051
  %v1053 = vmul.f32 %v1004, 1.442695
  %v1054 = vpow.pop %v1053
  %v1055 = vmul.f32 %v1005, 1.442695
  %v1056 = vpow.pop %v1055
  %v1057 = vmul.f32 %v1006, 1.442695
  %v1058 = vpow.pop %v1057
  %v1059 = vmul.f32 %v1007, 1.442695
  %v1060 = vpow.pop %v1059
  %v1061 = vmul.f32 %v1008, 1.442695
  %v1062 = vpow.pop %v1061
  %v1063 = vmul.f32 %v1009, 1.442695
  %v1064 = vpow.pop %v1063
  %v1065 = vmul.f32 %v1010, 1.442695
  %v1066 = vpow.pop %v1065
  %v1067 = vmul.f32 %v1011, 1.442695
  %v1068 = vpow.pop %v1067
  %v1069 = vmul.f32 %v1012, 1.442695
  %v1070 = vpow.pop %v1069
  %v1071 = vmul.f32 %v1013, 1.442695
  %v1072 = vpow.pop %v1071
  %v1073 = vmul.f32 %v1014, 1.442695
  %v1074 = vpow.pop %v1073
  %v1075 = vmul.f32 %v1015, 1.442695
  %v1076 = vpow.pop %v1075
  %v1077 = vmul.f32 %v1016, 1.442695
  %v1078 = vpow.pop %v1077
  %v1079 = vmul.f32 %v1017, 1.442695
  %v1080 = vpow.pop %v1079
  %v1081 = vmul.f32 %v1018, 1.442695
  %v1082 = vpow.pop %v1081
  %v1083 = vadd.f32 %v1020, 1.0
  %v1084 = vadd.f32 %v1022, 1.0
  %v1085 = vadd.f32 %v1024, 1.0
  %v1086 = vadd.f32 %v1026, 1.0
  %v1087 = vadd.f32 %v1028, 1.0
  %v1088 = vadd.f32 %v1030, 1.0
  %v1089 = vadd.f32 %v1032, 1.0
  %v1090 = vadd.f32 %v1034, 1.0
  %v1091 = vadd.f32 %v1036, 1.0
  %v1092 = vadd.f32 %v1038, 1.0
  %v1093 = vadd.f32 %v1040, 1.0
  %v1094 = vadd.f32 %v1042, 1.0
  %v1095 = vadd.f32 %v1044, 1.0
  %v1096 = vadd.f32 %v1046, 1.0
  %v1097 = vadd.f32 %v1048, 1.0
  %v1098 = vadd.f32 %v1050, 1.0
  %v1099 = vadd.f32 %v1052, 1.0
  %v1100 = vadd.f32 %v1054, 1.0
  %v1101 = vadd.f32 %v1056, 1.0
  %v1102 = vadd.f32 %v1058, 1.0
  %v1103 = vadd.f32 %v1060, 1.0
  %v1104 = vadd.f32 %v1062, 1.0
  %v1105 = vadd.f32 %v1064, 1.0
  %v1106 = vadd.f32 %v1066, 1.0
  %v1107 = vadd.f32 %v1068, 1.0
  %v1108 = vadd.f32 %v1070, 1.0
  %v1109 = vadd.f32 %v1072, 1.0
  %v1110 = vadd.f32 %v1074, 1.0
  %v1111 = vadd.f32 %v1076, 1.0
  %v1112 = vadd.f32 %v1078, 1.0
  %v1113 = vadd.f32 %v1080, 1.0
  %v1114 = vadd.f32 %v1082, 1.0
  %v1115 = vrcp.pop %v1083
  %v1116 = vmul.f32 1.0, %v1115
  %v1117 = vrcp.pop %v1084
  %v1118 = vmul.f32 1.0, %v1117
  %v1119 = vrcp.pop %v1085
  %v1120 = vmul.f32 1.0, %v1119
  %v1121 = vrcp.pop %v1086
  %v1122 = vmul.f32 1.0, %v1121
  %v1123 = vrcp.pop %v1087
  %v1124 = vmul.f32 1.0, %v1123
  %v1125 = vrcp.pop %v1088
  %v1126 = vmul.f32 1.0, %v1125
  %v1127 = vrcp.pop %v1089
  %v1128 = vmul.f32 1.0, %v1127
  %v1129 = vrcp.pop %v1090
  %v1130 = vmul.f32 1.0, %v1129
  %v1131 = vrcp.pop %v1091
  %v1132 = vmul.f32 1.0, %v1131
  %v1133 = vrcp.pop %v1092
  %v1134 = vmul.f32 1.0, %v1133
  %v1135 = vrcp.pop %v1093
  %v1136 = vmul.f32 1.0, %v1135
  %v1137 = vrcp.pop %v1094
  %v1138 = vmul.f32 1.0, %v1137
  %v1139 = vrcp.pop %v1095
  %v1140 = vmul.f32 1.0, %v1139
  %v1141 = vrcp.pop %v1096
  %v1142 = vmul.f32 1.0, %v1141
  %v1143 = vrcp.pop %v1097
  %v1144 = vmul.f32 1.0, %v1143
  %v1145 = vrcp.pop %v1098
  %v1146 = vmul.f32 1.0, %v1145
  %v1147 = vrcp.pop %v1099
  %v1148 = vmul.f32 1.0, %v1147
  %v1149 = vrcp.pop %v1100
  %v1150 = vmul.f32 1.0, %v1149
  %v1151 = vrcp.pop %v1101
  %v1152 = vmul.f32 1.0, %v1151
  %v1153 = vrcp.pop %v1102
  %v1154 = vmul.f32 1.0, %v1153
  %v1155 = vrcp.pop %v1103
  %v1156 = vmul.f32 1.0, %v1155
  %v1157 = vrcp.pop %v1104
  %v1158 = vmul.f32 1.0, %v1157
  %v1159 = vrcp.pop %v1105
  %v1160 = vmul.f32 1.0, %v1159
  %v1161 = vrcp.pop %v1106
  %v1162 = vmul.f32 1.0, %v1161
  %v1163 = vrcp.pop %v1107
  %v1164 = vmul.f32 1.0, %v1163
  %v1165 = vrcp.pop %v1108
  %v1166 = vmul.f32 1.0, %v1165
  %v1167 = vrcp.pop %v1109
  %v1168 = vmul.f32 1.0, %v1167
  %v1169 = vrcp.pop %v1110
  %v1170 = vmul.f32 1.0, %v1169
  %v1171 = vrcp.pop %v1111
  %v1172 = vmul.f32 1.0, %v1171
  %v1173 = vrcp.pop %v1112
  %v1174 = vmul.f32 1.0, %v1173
  %v1175 = vrcp.pop %v1113
  %v1176 = vmul.f32 1.0, %v1175
  %v1177 = vrcp.pop %v1114
  %v1178 = vmul.f32 1.0, %v1177
  %v1179 = vmul.f32 %v829, %v1116
  %v1180 = vmul.f32 %v834, %v1118
  %v1181 = vmul.f32 %v839, %v1120
  %v1182 = vmul.f32 %v844, %v1122
  %v1183 = vmul.f32 %v849, %v1124
  %v1184 = vmul.f32 %v854, %v1126
  %v1185 = vmul.f32 %v859, %v1128
  %v1186 = vmul.f32 %v864, %v1130
  %v1187 = vmul.f32 %v869, %v1132
  %v1188 = vmul.f32 %v874, %v1134
  %v1189 = vmul.f32 %v879, %v1136
  %v1190 = vmul.f32 %v884, %v1138
  %v1191 = vmul.f32 %v889, %v1140
  %v1192 = vmul.f32 %v894, %v1142
  %v1193 = vmul.f32 %v899, %v1144
  %v1194 = vmul.f32 %v904, %v1146
  %v1195 = vmul.f32 %v909, %v1148
  %v1196 = vmul.f32 %v914, %v1150
  %v1197 = vmul.f32 %v919, %v1152
  %v1198 = vmul.f32 %v924, %v1154
  %v1199 = vmul.f32 %v929, %v1156
  %v1200 = vmul.f32 %v934, %v1158
  %v1201 = vmul.f32 %v939, %v1160
  %v1202 = vmul.f32 %v944, %v1162
  %v1203 = vmul.f32 %v949, %v1164
  %v1204 = vmul.f32 %v954, %v1166
  %v1205 = vmul.f32 %v959, %v1168
  %v1206 = vmul.f32 %v964, %v1170
  %v1207 = vmul.f32 %v969, %v1172
  %v1208 = vmul.f32 %v974, %v1174
  %v1209 = vmul.f32 %v979, %v1176
  %v1210 = vmul.f32 %v984, %v1178
  %v1211 = vld [vmem:[#allocation3] sm:$0xff]
  %v1212 = vld [vmem:[#allocation3 + $0x8] sm:$0xff]
  %v1213 = vld [vmem:[#allocation3 + $0x10] sm:$0xff]
  %v1214 = vld [vmem:[#allocation3 + $0x18] sm:$0xff]
  %v1215 = vld [vmem:[#allocation3 + $0x20] sm:$0xff]
  %v1216 = vld [vmem:[#allocation3 + $0x28] sm:$0xff]
  %v1217 = vld [vmem:[#allocation3 + $0x30] sm:$0xff]
  %v1218 = vld [vmem:[#allocation3 + $0x38] sm:$0xff]
  %v1219 = vld [vmem:[#allocation3 + $0x40] sm:$0xff]
  %v1220 = vld [vmem:[#allocation3 + $0x48] sm:$0xff]
  %v1221 = vld [vmem:[#allocation3 + $0x50] sm:$0xff]
  %v1222 = vld [vmem:[#allocation3 + $0x58] sm:$0xff]
  %v1223 = vld [vmem:[#allocation3 + $0x60] sm:$0xff]
  %v1224 = vld [vmem:[#allocation3 + $0x68] sm:$0xff]
  %v1225 = vld [vmem:[#allocation3 + $0x70] sm:$0xff]
  %v1226 = vld [vmem:[#allocation3 + $0x78] sm:$0xff]
  %v1227 = vld [vmem:[#allocation3 + $0x80] sm:$0xff]
  %v1228 = vld [vmem:[#allocation3 + $0x88] sm:$0xff]
  %v1229 = vld [vmem:[#allocation3 + $0x90] sm:$0xff]
  %v1230 = vld [vmem:[#allocation3 + $0x98] sm:$0xff]
  %v1231 = vld [vmem:[#allocation3 + $0xa0] sm:$0xff]
  %v1232 = vld [vmem:[#allocation3 + $0xa8] sm:$0xff]
  %v1233 = vld [vmem:[#allocation3 + $0xb0] sm:$0xff]
  %v1234 = vld [vmem:[#allocation3 + $0xb8] sm:$0xff]
  %v1235 = vld [vmem:[#allocation3 + $0xc0] sm:$0xff]
  %v1236 = vld [vmem:[#allocation3 + $0xc8] sm:$0xff]
  %v1237 = vld [vmem:[#allocation3 + $0xd0] sm:$0xff]
  %v1238 = vld [vmem:[#allocation3 + $0xd8] sm:$0xff]
  %v1239 = vld [vmem:[#allocation3 + $0xe0] sm:$0xff]
  %v1240 = vld [vmem:[#allocation3 + $0xe8] sm:$0xff]
  %v1241 = vld [vmem:[#allocation3 + $0xf0] sm:$0xff]
  %v1242 = vld [vmem:[#allocation3 + $0xf8] sm:$0xff]
  %v1243 = vld [vmem:[%s5] sm:$0xff]
  %v1244 = vld [vmem:[%s5 + $0x8] sm:$0xff]
  %v1245 = vld [vmem:[%s5 + $0x10] sm:$0xff]
  %v1246 = vld [vmem:[%s5 + $0x18] sm:$0xff]
  %v1247 = vld [vmem:[%s5 + $0x20] sm:$0xff]
  %v1248 = vld [vmem:[%s5 + $0x28] sm:$0xff]
  %v1249 = vld [vmem:[%s5 + $0x30] sm:$0xff]
  %v1250 = vld [vmem:[%s5 + $0x38] sm:$0xff]
  %vm1251 = vcmask 523264
  %v1253 = vsel %vm1251, %v1179, 0
  %v1256 = vsel %vm1251, %v1180, 0
  %v1259 = vsel %vm1251, %v1181, 0
  %v1262 = vsel %vm1251, %v1182, 0
  %v1265 = vsel %vm1251, %v1183, 0
  %v1268 = vsel %vm1251, %v1184, 0
  %v1271 = vsel %vm1251, %v1185, 0
  %v1274 = vsel %vm1251, %v1186, 0
  %v1277 = vsel %vm1251, %v1187, 0
  %v1280 = vsel %vm1251, %v1188, 0
  %v1283 = vsel %vm1251, %v1189, 0
  %v1286 = vsel %vm1251, %v1190, 0
  %v1289 = vsel %vm1251, %v1191, 0
  %v1292 = vsel %vm1251, %v1192, 0
  %v1295 = vsel %vm1251, %v1193, 0
  %v1298 = vsel %vm1251, %v1194, 0
  %v1301 = vsel %vm1251, %v1195, 0
  %v1304 = vsel %vm1251, %v1196, 0
  %v1307 = vsel %vm1251, %v1197, 0
  %v1310 = vsel %vm1251, %v1198, 0
  %v1313 = vsel %vm1251, %v1199, 0
  %v1316 = vsel %vm1251, %v1200, 0
  %v1319 = vsel %vm1251, %v1201, 0
  %v1322 = vsel %vm1251, %v1202, 0
  %v1325 = vsel %vm1251, %v1203, 0
  %v1328 = vsel %vm1251, %v1204, 0
  %v1331 = vsel %vm1251, %v1205, 0
  %v1334 = vsel %vm1251, %v1206, 0
  %v1337 = vsel %vm1251, %v1207, 0
  %v1340 = vsel %vm1251, %v1208, 0
  %v1343 = vsel %vm1251, %v1209, 0
  %v1346 = vsel %vm1251, %v1210, 0
  %1348 = vmatprep.subr.mxu0 0.0
  %1349 = vmatpush1.msra.mxu0 %v1243
  %1350 = vmatprep.subr.mxu0 0.0
  %1351 = vmatpush1.msra.mxu0 %v1244
  %1352 = vmatprep.subr.mxu0 0.0
  %1353 = vmatpush1.msra.mxu0 %v1245
  %1354 = vmatprep.subr.mxu0 0.0
  %1355 = vmatpush1.msra.mxu0 %v1246
  %1356 = vmatprep.subr.mxu0 0.0
  %1357 = vmatpush1.msra.mxu0 %v1247
  %1358 = vmatprep.subr.mxu0 0.0
  %1359 = vmatpush1.msra.mxu0 %v1248
  %1360 = vmatprep.subr.mxu0 0.0
  %1361 = vmatpush1.msra.mxu0 %v1249
  %1362 = vmatprep.subr.mxu0 0.0
  %1363 = vmatpush1.msra.mxu0 %v1250
  %1364 = vmatprep.subr.mxu0 0.0
  %1365 = vmatpush1.msra.mxu0 0.0
  %1366 = vmatprep.subr.mxu0 0.0
  %1367 = vmatpush1.msra.mxu0 0.0
  %1368 = vmatprep.subr.mxu0 0.0
  %1369 = vmatpush1.msra.mxu0 0.0
  %1370 = vmatprep.subr.mxu0 0.0
  %1371 = vmatpush1.msra.mxu0 0.0
  %1372 = vmatprep.subr.mxu0 0.0
  %1373 = vmatpush1.msra.mxu0 0.0
  %1374 = vmatprep.subr.mxu0 0.0
  %1375 = vmatpush1.msra.mxu0 0.0
  %1376 = vmatprep.subr.mxu0 0.0
  %1377 = vmatpush1.msra.mxu0 0.0
  %1378 = vmatprep.subr.mxu0 0.0
  %1379 = vmatpush1.msra.mxu0 0.0
  %1380 = vmatprep.subr.mxu0 0.0
  %1381 = vmatpush1.msra.mxu0 0.0
  %1382 = vmatprep.subr.mxu0 0.0
  %1383 = vmatpush1.msra.mxu0 0.0
  %1384 = vmatprep.subr.mxu0 0.0
  %1385 = vmatpush1.msra.mxu0 0.0
  %1386 = vmatprep.subr.mxu0 0.0
  %1387 = vmatpush1.msra.mxu0 0.0
  %1388 = vmatprep.subr.mxu0 0.0
  %1389 = vmatpush1.msra.mxu0 0.0
  %1390 = vmatprep.subr.mxu0 0.0
  %1391 = vmatpush1.msra.mxu0 0.0
  %1392 = vmatprep.subr.mxu0 0.0
  %1393 = vmatpush1.msra.mxu0 0.0
  %1394 = vmatprep.subr.mxu0 0.0
  %1395 = vmatpush1.msra.mxu0 0.0
  %1396 = vmatprep.subr.mxu0 0.0
  %1397 = vmatpush1.msra.mxu0 0.0
  %1398 = vmatprep.subr.mxu0 0.0
  %1399 = vmatpush1.msra.mxu0 0.0
  %1400 = vmatprep.subr.mxu0 0.0
  %1401 = vmatpush1.msra.mxu0 0.0
  %1402 = vmatprep.subr.mxu0 0.0
  %1403 = vmatpush1.msra.mxu0 0.0
  %1404 = vmatprep.subr.mxu0 0.0
  %1405 = vmatpush1.msra.mxu0 0.0
  %1406 = vmatprep.subr.mxu0 0.0
  %1407 = vmatpush1.msra.mxu0 0.0
  %1408 = vmatprep.subr.mxu0 0.0
  %1409 = vmatpush1.msra.mxu0 0.0
  %1410 = vmatprep.subr.mxu0 0.0
  %1411 = vmatpush1.msra.mxu0 0.0
  %1412 = vmatprep.mubr.f32.mxu0 0.0
  %1413 = vmatmul.mubr.f32.gmra.mrb[0].mxu0 %v1253
  %v1414 = vpop.f32.mrb[0].mxu0
  %v1415 = vadd.f32 0.0, %v1414
  %v1416 = vpop.f32.mrb[0].mxu0
  %1417 = vmatprep.mubr.f32.mxu0 0.0
  %1418 = vmatmul.mubr.f32.gmra.mrb[0].mxu0 %v1256
  %v1419 = vpop.f32.mrb[0].mxu0
  %v1420 = vadd.f32 0.0, %v1419
  %v1421 = vpop.f32.mrb[0].mxu0
  %1422 = vmatprep.mubr.f32.mxu0 0.0
  %1423 = vmatmul.mubr.f32.gmra.mrb[0].mxu0 %v1259
  %v1424 = vpop.f32.mrb[0].mxu0
  %v1425 = vadd.f32 0.0, %v1424
  %v1426 = vpop.f32.mrb[0].mxu0
  %1427 = vmatprep.mubr.f32.mxu0 0.0
  %1428 = vmatmul.mubr.f32.gmra.mrb[0].mxu0 %v1262
  %v1429 = vpop.f32.mrb[0].mxu0
  %v1430 = vadd.f32 0.0, %v1429
  %v1431 = vpop.f32.mrb[0].mxu0
  %1432 = vmatprep.mubr.f32.mxu0 0.0
  %1433 = vmatmul.mubr.f32.gmra.mrb[0].mxu0 %v1265
  %v1434 = vpop.f32.mrb[0].mxu0
  %v1435 = vadd.f32 0.0, %v1434
  %v1436 = vpop.f32.mrb[0].mxu0
  %1437 = vmatprep.mubr.f32.mxu0 0.0
  %1438 = vmatmul.mubr.f32.gmra.mrb[0].mxu0 %v1268
  %v1439 = vpop.f32.mrb[0].mxu0
  %v1440 = vadd.f32 0.0, %v1439
  %v1441 = vpop.f32.mrb[0].mxu0
  %1442 = vmatprep.mubr.f32.mxu0 0.0
  %1443 = vmatmul.mubr.f32.gmra.mrb[0].mxu0 %v1271
  %v1444 = vpop.f32.mrb[0].mxu0
  %v1445 = vadd.f32 0.0, %v1444
  %v1446 = vpop.f32.mrb[0].mxu0
  %1447 = vmatprep.mubr.f32.mxu0 0.0
  %1448 = vmatmul.mubr.f32.gmra.mrb[0].mxu0 %v1274
  %v1449 = vpop.f32.mrb[0].mxu0
  %v1450 = vadd.f32 0.0, %v1449
  %v1451 = vpop.f32.mrb[0].mxu0
  %1452 = vmatprep.mubr.f32.mxu0 0.0
  %1453 = vmatmul.mubr.f32.gmra.mrb[0].mxu0 %v1277
  %v1454 = vpop.f32.mrb[0].mxu0
  %v1455 = vadd.f32 0.0, %v1454
  %v1456 = vpop.f32.mrb[0].mxu0
  %1457 = vmatprep.mubr.f32.mxu0 0.0
  %1458 = vmatmul.mubr.f32.gmra.mrb[0].mxu0 %v1280
  %v1459 = vpop.f32.mrb[0].mxu0
  %v1460 = vadd.f32 0.0, %v1459
  %v1461 = vpop.f32.mrb[0].mxu0
  %1462 = vmatprep.mubr.f32.mxu0 0.0
  %1463 = vmatmul.mubr.f32.gmra.mrb[0].mxu0 %v1283
  %v1464 = vpop.f32.mrb[0].mxu0
  %v1465 = vadd.f32 0.0, %v1464
  %v1466 = vpop.f32.mrb[0].mxu0
  %1467 = vmatprep.mubr.f32.mxu0 0.0
  %1468 = vmatmul.mubr.f32.gmra.mrb[0].mxu0 %v1286
  %v1469 = vpop.f32.mrb[0].mxu0
  %v1470 = vadd.f32 0.0, %v1469
  %v1471 = vpop.f32.mrb[0].mxu0
  %1472 = vmatprep.mubr.f32.mxu0 0.0
  %1473 = vmatmul.mubr.f32.gmra.mrb[0].mxu0 %v1289
  %v1474 = vpop.f32.mrb[0].mxu0
  %v1475 = vadd.f32 0.0, %v1474
  %v1476 = vpop.f32.mrb[0].mxu0
  %1477 = vmatprep.mubr.f32.mxu0 0.0
  %1478 = vmatmul.mubr.f32.gmra.mrb[0].mxu0 %v1292
  %v1479 = vpop.f32.mrb[0].mxu0
  %v1480 = vadd.f32 0.0, %v1479
  %v1481 = vpop.f32.mrb[0].mxu0
  %1482 = vmatprep.mubr.f32.mxu0 0.0
  %1483 = vmatmul.mubr.f32.gmra.mrb[0].mxu0 %v1295
  %v1484 = vpop.f32.mrb[0].mxu0
  %v1485 = vadd.f32 0.0, %v1484
  %v1486 = vpop.f32.mrb[0].mxu0
  %1487 = vmatprep.mubr.f32.mxu0 0.0
  %1488 = vmatmul.mubr.f32.gmra.mrb[0].mxu0 %v1298
  %v1489 = vpop.f32.mrb[0].mxu0
  %v1490 = vadd.f32 0.0, %v1489
  %v1491 = vpop.f32.mrb[0].mxu0
  %1492 = vmatprep.mubr.f32.mxu0 0.0
  %1493 = vmatmul.mubr.f32.gmra.mrb[0].mxu0 %v1301
  %v1494 = vpop.f32.mrb[0].mxu0
  %v1495 = vadd.f32 0.0, %v1494
  %v1496 = vpop.f32.mrb[0].mxu0
  %1497 = vmatprep.mubr.f32.mxu0 0.0
  %1498 = vmatmul.mubr.f32.gmra.mrb[0].mxu0 %v1304
  %v1499 = vpop.f32.mrb[0].mxu0
  %v1500 = vadd.f32 0.0, %v1499
  %v1501 = vpop.f32.mrb[0].mxu0
  %1502 = vmatprep.mubr.f32.mxu0 0.0
  %1503 = vmatmul.mubr.f32.gmra.mrb[0].mxu0 %v1307
  %v1504 = vpop.f32.mrb[0].mxu0
  %v1505 = vadd.f32 0.0, %v1504
  %v1506 = vpop.f32.mrb[0].mxu0
  %1507 = vmatprep.mubr.f32.mxu0 0.0
  %1508 = vmatmul.mubr.f32.gmra.mrb[0].mxu0 %v1310
  %v1509 = vpop.f32.mrb[0].mxu0
  %v1510 = vadd.f32 0.0, %v1509
  %v1511 = vpop.f32.mrb[0].mxu0
  %1512 = vmatprep.mubr.f32.mxu0 0.0
  %1513 = vmatmul.mubr.f32.gmra.mrb[0].mxu0 %v1313
  %v1514 = vpop.f32.mrb[0].mxu0
  %v1515 = vadd.f32 0.0, %v1514
  %v1516 = vpop.f32.mrb[0].mxu0
  %1517 = vmatprep.mubr.f32.mxu0 0.0
  %1518 = vmatmul.mubr.f32.gmra.mrb[0].mxu0 %v1316
  %v1519 = vpop.f32.mrb[0].mxu0
  %v1520 = vadd.f32 0.0, %v1519
  %v1521 = vpop.f32.mrb[0].mxu0
  %1522 = vmatprep.mubr.f32.mxu0 0.0
  %1523 = vmatmul.mubr.f32.gmra.mrb[0].mxu0 %v1319
  %v1524 = vpop.f32.mrb[0].mxu0
  %v1525 = vadd.f32 0.0, %v1524
  %v1526 = vpop.f32.mrb[0].mxu0
  %1527 = vmatprep.mubr.f32.mxu0 0.0
  %1528 = vmatmul.mubr.f32.gmra.mrb[0].mxu0 %v1322
  %v1529 = vpop.f32.mrb[0].mxu0
  %v1530 = vadd.f32 0.0, %v1529
  %v1531 = vpop.f32.mrb[0].mxu0
  %1532 = vmatprep.mubr.f32.mxu0 0.0
  %1533 = vmatmul.mubr.f32.gmra.mrb[0].mxu0 %v1325
  %v1534 = vpop.f32.mrb[0].mxu0
  %v1535 = vadd.f32 0.0, %v1534
  %v1536 = vpop.f32.mrb[0].mxu0
  %1537 = vmatprep.mubr.f32.mxu0 0.0
  %1538 = vmatmul.mubr.f32.gmra.mrb[0].mxu0 %v1328
  %v1539 = vpop.f32.mrb[0].mxu0
  %v1540 = vadd.f32 0.0, %v1539
  %v1541 = vpop.f32.mrb[0].mxu0
  %1542 = vmatprep.mubr.f32.mxu0 0.0
  %1543 = vmatmul.mubr.f32.gmra.mrb[0].mxu0 %v1331
  %v1544 = vpop.f32.mrb[0].mxu0
  %v1545 = vadd.f32 0.0, %v1544
  %v1546 = vpop.f32.mrb[0].mxu0
  %1547 = vmatprep.mubr.f32.mxu0 0.0
  %1548 = vmatmul.mubr.f32.gmra.mrb[0].mxu0 %v1334
  %v1549 = vpop.f32.mrb[0].mxu0
  %v1550 = vadd.f32 0.0, %v1549
  %v1551 = vpop.f32.mrb[0].mxu0
  %1552 = vmatprep.mubr.f32.mxu0 0.0
  %1553 = vmatmul.mubr.f32.gmra.mrb[0].mxu0 %v1337
  %v1554 = vpop.f32.mrb[0].mxu0
  %v1555 = vadd.f32 0.0, %v1554
  %v1556 = vpop.f32.mrb[0].mxu0
  %1557 = vmatprep.mubr.f32.mxu0 0.0
  %1558 = vmatmul.mubr.f32.gmra.mrb[0].mxu0 %v1340
  %v1559 = vpop.f32.mrb[0].mxu0
  %v1560 = vadd.f32 0.0, %v1559
  %v1561 = vpop.f32.mrb[0].mxu0
  %1562 = vmatprep.mubr.f32.mxu0 0.0
  %1563 = vmatmul.mubr.f32.gmra.mrb[0].mxu0 %v1343
  %v1564 = vpop.f32.mrb[0].mxu0
  %v1565 = vadd.f32 0.0, %v1564
  %v1566 = vpop.f32.mrb[0].mxu0
  %1567 = vmatprep.mubr.f32.mxu0 0.0
  %1568 = vmatmul.mubr.f32.gmra.mrb[0].mxu0 %v1346
  %v1569 = vpop.f32.mrb[0].mxu0
  %v1570 = vadd.f32 0.0, %v1569
  %v1571 = vpop.f32.mrb[0].mxu0
  %1572 = vdwg.mxu0
  %v1573 = vadd.f32 %v1211, %v1415
  %v1574 = vadd.f32 %v1212, %v1420
  %v1575 = vadd.f32 %v1213, %v1425
  %v1576 = vadd.f32 %v1214, %v1430
  %v1577 = vadd.f32 %v1215, %v1435
  %v1578 = vadd.f32 %v1216, %v1440
  %v1579 = vadd.f32 %v1217, %v1445
  %v1580 = vadd.f32 %v1218, %v1450
  %v1581 = vadd.f32 %v1219, %v1455
  %v1582 = vadd.f32 %v1220, %v1460
  %v1583 = vadd.f32 %v1221, %v1465
  %v1584 = vadd.f32 %v1222, %v1470
  %v1585 = vadd.f32 %v1223, %v1475
  %v1586 = vadd.f32 %v1224, %v1480
  %v1587 = vadd.f32 %v1225, %v1485
  %v1588 = vadd.f32 %v1226, %v1490
  %v1589 = vadd.f32 %v1227, %v1495
  %v1590 = vadd.f32 %v1228, %v1500
  %v1591 = vadd.f32 %v1229, %v1505
  %v1592 = vadd.f32 %v1230, %v1510
  %v1593 = vadd.f32 %v1231, %v1515
  %v1594 = vadd.f32 %v1232, %v1520
  %v1595 = vadd.f32 %v1233, %v1525
  %v1596 = vadd.f32 %v1234, %v1530
  %v1597 = vadd.f32 %v1235, %v1535
  %v1598 = vadd.f32 %v1236, %v1540
  %v1599 = vadd.f32 %v1237, %v1545
  %v1600 = vadd.f32 %v1238, %v1550
  %v1601 = vadd.f32 %v1239, %v1555
  %v1602 = vadd.f32 %v1240, %v1560
  %v1603 = vadd.f32 %v1241, %v1565
  %v1604 = vadd.f32 %v1242, %v1570
  %1605 = vst.msk [vmem:[#allocation3] sm:$0xff] %vm665, %v1573
  %1606 = vst.msk [vmem:[#allocation3 + $0x8] sm:$0xff] %vm665, %v1574
  %1607 = vst.msk [vmem:[#allocation3 + $0x10] sm:$0xff] %vm665, %v1575
  %1608 = vst.msk [vmem:[#allocation3 + $0x18] sm:$0xff] %vm665, %v1576
  %1609 = vst.msk [vmem:[#allocation3 + $0x20] sm:$0xff] %vm665, %v1577
  %1610 = vst.msk [vmem:[#allocation3 + $0x28] sm:$0xff] %vm665, %v1578
  %1611 = vst.msk [vmem:[#allocation3 + $0x30] sm:$0xff] %vm665, %v1579
  %1612 = vst.msk [vmem:[#allocation3 + $0x38] sm:$0xff] %vm665, %v1580
  %1613 = vst.msk [vmem:[#allocation3 + $0x40] sm:$0xff] %vm665, %v1581
  %1614 = vst.msk [vmem:[#allocation3 + $0x48] sm:$0xff] %vm665, %v1582
  %1615 = vst.msk [vmem:[#allocation3 + $0x50] sm:$0xff] %vm665, %v1583
  %1616 = vst.msk [vmem:[#allocation3 + $0x58] sm:$0xff] %vm665, %v1584
  %1617 = vst.msk [vmem:[#allocation3 + $0x60] sm:$0xff] %vm665, %v1585
  %1618 = vst.msk [vmem:[#allocation3 + $0x68] sm:$0xff] %vm665, %v1586
  %1619 = vst.msk [vmem:[#allocation3 + $0x70] sm:$0xff] %vm665, %v1587
  %1620 = vst.msk [vmem:[#allocation3 + $0x78] sm:$0xff] %vm665, %v1588
  %1621 = vst.msk [vmem:[#allocation3 + $0x80] sm:$0xff] %vm665, %v1589
  %1622 = vst.msk [vmem:[#allocation3 + $0x88] sm:$0xff] %vm665, %v1590
  %1623 = vst.msk [vmem:[#allocation3 + $0x90] sm:$0xff] %vm665, %v1591
  %1624 = vst.msk [vmem:[#allocation3 + $0x98] sm:$0xff] %vm665, %v1592
  %1625 = vst.msk [vmem:[#allocation3 + $0xa0] sm:$0xff] %vm665, %v1593
  %1626 = vst.msk [vmem:[#allocation3 + $0xa8] sm:$0xff] %vm665, %v1594
  %1627 = vst.msk [vmem:[#allocation3 + $0xb0] sm:$0xff] %vm665, %v1595
  %1628 = vst.msk [vmem:[#allocation3 + $0xb8] sm:$0xff] %vm665, %v1596
  %1629 = vst.msk [vmem:[#allocation3 + $0xc0] sm:$0xff] %vm665, %v1597
  %1630 = vst.msk [vmem:[#allocation3 + $0xc8] sm:$0xff] %vm665, %v1598
  %1631 = vst.msk [vmem:[#allocation3 + $0xd0] sm:$0xff] %vm665, %v1599
  %1632 = vst.msk [vmem:[#allocation3 + $0xd8] sm:$0xff] %vm665, %v1600
  %1633 = vst.msk [vmem:[#allocation3 + $0xe0] sm:$0xff] %vm665, %v1601
  %1634 = vst.msk [vmem:[#allocation3 + $0xe8] sm:$0xff] %vm665, %v1602
  %1635 = vst.msk [vmem:[#allocation3 + $0xf0] sm:$0xff] %vm665, %v1603
  %1636 = vst.msk [vmem:[#allocation3 + $0xf8] sm:$0xff] %vm665, %v1604
  // Predicated region
  $region34: #{tpu_custom_call.1} parent=0 // pred_check
    %p1637 = pneg %p26
  $region35: #{tpu_custom_call.1} parent=0 // pred_check_branch
    %1639 = sbr.rel (%p1637) target = $region37
  $region36: #{tpu_custom_call.1} parent=0 // pred_region
    %v1640 = vld [vmem:[#allocation3] sm:$0xff]
    %v1641 = vld [vmem:[#allocation3 + $0x8] sm:$0xff]
    %v1642 = vld [vmem:[#allocation3 + $0x10] sm:$0xff]
    %v1643 = vld [vmem:[#allocation3 + $0x18] sm:$0xff]
    %v1644 = vld [vmem:[#allocation3 + $0x20] sm:$0xff]
    %v1645 = vld [vmem:[#allocation3 + $0x28] sm:$0xff]
    %v1646 = vld [vmem:[#allocation3 + $0x30] sm:$0xff]
    %v1647 = vld [vmem:[#allocation3 + $0x38] sm:$0xff]
    %v1648 = vld [vmem:[#allocation3 + $0x40] sm:$0xff]
    %v1649 = vld [vmem:[#allocation3 + $0x48] sm:$0xff]
    %v1650 = vld [vmem:[#allocation3 + $0x50] sm:$0xff]
    %v1651 = vld [vmem:[#allocation3 + $0x58] sm:$0xff]
    %v1652 = vld [vmem:[#allocation3 + $0x60] sm:$0xff]
    %v1653 = vld [vmem:[#allocation3 + $0x68] sm:$0xff]
    %v1654 = vld [vmem:[#allocation3 + $0x70] sm:$0xff]
    %v1655 = vld [vmem:[#allocation3 + $0x78] sm:$0xff]
    %v1656 = vld [vmem:[#allocation3 + $0x80] sm:$0xff]
    %v1657 = vld [vmem:[#allocation3 + $0x88] sm:$0xff]
    %v1658 = vld [vmem:[#allocation3 + $0x90] sm:$0xff]
    %v1659 = vld [vmem:[#allocation3 + $0x98] sm:$0xff]
    %v1660 = vld [vmem:[#allocation3 + $0xa0] sm:$0xff]
    %v1661 = vld [vmem:[#allocation3 + $0xa8] sm:$0xff]
    %v1662 = vld [vmem:[#allocation3 + $0xb0] sm:$0xff]
    %v1663 = vld [vmem:[#allocation3 + $0xb8] sm:$0xff]
    %v1664 = vld [vmem:[#allocation3 + $0xc0] sm:$0xff]
    %v1665 = vld [vmem:[#allocation3 + $0xc8] sm:$0xff]
    %v1666 = vld [vmem:[#allocation3 + $0xd0] sm:$0xff]
    %v1667 = vld [vmem:[#allocation3 + $0xd8] sm:$0xff]
    %v1668 = vld [vmem:[#allocation3 + $0xe0] sm:$0xff]
    %v1669 = vld [vmem:[#allocation3 + $0xe8] sm:$0xff]
    %v1670 = vld [vmem:[#allocation3 + $0xf0] sm:$0xff]
    %v1671 = vld [vmem:[#allocation3 + $0xf8] sm:$0xff]
    %v1672 = vld [vmem:[%s6] sm:$0x1]
    %v1674 = vlaneseq
    %v1675 = vshrl.u32 %v1674, 7
    %v1676 = vsub.s32 0, %v1675
    %v1677 = vrot.slane %v1672, %v1676
    %v1679 = vadd.f32 %v1640, %v1677
    %v1680 = vadd.f32 %v1641, %v1677
    %v1681 = vadd.f32 %v1642, %v1677
    %v1682 = vadd.f32 %v1643, %v1677
    %v1683 = vadd.f32 %v1644, %v1677
    %v1684 = vadd.f32 %v1645, %v1677
    %v1685 = vadd.f32 %v1646, %v1677
    %v1686 = vadd.f32 %v1647, %v1677
    %v1687 = vadd.f32 %v1648, %v1677
    %v1688 = vadd.f32 %v1649, %v1677
    %v1689 = vadd.f32 %v1650, %v1677
    %v1690 = vadd.f32 %v1651, %v1677
    %v1691 = vadd.f32 %v1652, %v1677
    %v1692 = vadd.f32 %v1653, %v1677
    %v1693 = vadd.f32 %v1654, %v1677
    %v1694 = vadd.f32 %v1655, %v1677
    %v1695 = vadd.f32 %v1656, %v1677
    %v1696 = vadd.f32 %v1657, %v1677
    %v1697 = vadd.f32 %v1658, %v1677
    %v1698 = vadd.f32 %v1659, %v1677
    %v1699 = vadd.f32 %v1660, %v1677
    %v1700 = vadd.f32 %v1661, %v1677
    %v1701 = vadd.f32 %v1662, %v1677
    %v1702 = vadd.f32 %v1663, %v1677
    %v1703 = vadd.f32 %v1664, %v1677
    %v1704 = vadd.f32 %v1665, %v1677
    %v1705 = vadd.f32 %v1666, %v1677
    %v1706 = vadd.f32 %v1667, %v1677
    %v1707 = vadd.f32 %v1668, %v1677
    %v1708 = vadd.f32 %v1669, %v1677
    %v1709 = vadd.f32 %v1670, %v1677
    %v1710 = vadd.f32 %v1671, %v1677
    %1711 = vst.msk [vmem:[%s7] sm:$0xff] %vm665, %v1679
    %1712 = vst.msk [vmem:[%s7 + $0x8] sm:$0xff] %vm665, %v1680
    %1713 = vst.msk [vmem:[%s7 + $0x10] sm:$0xff] %vm665, %v1681
    %1714 = vst.msk [vmem:[%s7 + $0x18] sm:$0xff] %vm665, %v1682
    %1715 = vst.msk [vmem:[%s7 + $0x20] sm:$0xff] %vm665, %v1683
    %1716 = vst.msk [vmem:[%s7 + $0x28] sm:$0xff] %vm665, %v1684
    %1717 = vst.msk [vmem:[%s7 + $0x30] sm:$0xff] %vm665, %v1685
    %1718 = vst.msk [vmem:[%s7 + $0x38] sm:$0xff] %vm665, %v1686
    %1719 = vst.msk [vmem:[%s7 + $0x40] sm:$0xff] %vm665, %v1687
    %1720 = vst.msk [vmem:[%s7 + $0x48] sm:$0xff] %vm665, %v1688
    %1721 = vst.msk [vmem:[%s7 + $0x50] sm:$0xff] %vm665, %v1689
    %1722 = vst.msk [vmem:[%s7 + $0x58] sm:$0xff] %vm665, %v1690
    %1723 = vst.msk [vmem:[%s7 + $0x60] sm:$0xff] %vm665, %v1691
    %1724 = vst.msk [vmem:[%s7 + $0x68] sm:$0xff] %vm665, %v1692
    %1725 = vst.msk [vmem:[%s7 + $0x70] sm:$0xff] %vm665, %v1693
    %1726 = vst.msk [vmem:[%s7 + $0x78] sm:$0xff] %vm665, %v1694
    %1727 = vst.msk [vmem:[%s7 + $0x80] sm:$0xff] %vm665, %v1695
    %1728 = vst.msk [vmem:[%s7 + $0x88] sm:$0xff] %vm665, %v1696
    %1729 = vst.msk [vmem:[%s7 + $0x90] sm:$0xff] %vm665, %v1697
    %1730 = vst.msk [vmem:[%s7 + $0x98] sm:$0xff] %vm665, %v1698
    %1731 = vst.msk [vmem:[%s7 + $0xa0] sm:$0xff] %vm665, %v1699
    %1732 = vst.msk [vmem:[%s7 + $0xa8] sm:$0xff] %vm665, %v1700
    %1733 = vst.msk [vmem:[%s7 + $0xb0] sm:$0xff] %vm665, %v1701
    %1734 = vst.msk [vmem:[%s7 + $0xb8] sm:$0xff] %vm665, %v1702
    %1735 = vst.msk [vmem:[%s7 + $0xc0] sm:$0xff] %vm665, %v1703
    %1736 = vst.msk [vmem:[%s7 + $0xc8] sm:$0xff] %vm665, %v1704
    %1737 = vst.msk [vmem:[%s7 + $0xd0] sm:$0xff] %vm665, %v1705
    %1738 = vst.msk [vmem:[%s7 + $0xd8] sm:$0xff] %vm665, %v1706
    %1739 = vst.msk [vmem:[%s7 + $0xe0] sm:$0xff] %vm665, %v1707
    %1740 = vst.msk [vmem:[%s7 + $0xe8] sm:$0xff] %vm665, %v1708
    %1741 = vst.msk [vmem:[%s7 + $0xf0] sm:$0xff] %vm665, %v1709
    %1742 = vst.msk [vmem:[%s7 + $0xf8] sm:$0xff] %vm665, %v1710
  $region37: #{tpu_custom_call.1} parent=0 // pred_fallthru
    _
  // Predicated region
  $region38: #{tpu_custom_call.1} parent=0 // pred_check
    _
  $region39: #{tpu_custom_call.1} parent=0 // pred_check_branch
    %1744 = sbr.rel (0) target = $region41
  $region40: #{tpu_custom_call.1} parent=0 // pred_region
    _
  $region41: #{tpu_custom_call.1} parent=0 // pred_fallthru
    _
  // Predicated region
  $region42: #{tpu_custom_call.1} parent=0 // pred_check
    _
  $region43: #{tpu_custom_call.1} parent=0 // pred_check_branch
    %1746 = sbr.rel (0) target = $region45
  $region44: #{tpu_custom_call.1} parent=0 // pred_region
    _
  $region45: #{tpu_custom_call.1} parent=0 // pred_fallthru
    _

</llo_original>
